<compile_context>
chip_gen: v6e
topology: v6e:2x2x1
jax: 0.10.0
libtpu: 0.0.40
codegen_flags: <defaults>
</compile_context>

<pallas_src>
import functools

import jax
import jax.numpy as jnp
import numpy as np
from jax import lax
from jax.experimental import pallas as pl
from jax.experimental.pallas import tpu as pltpu


# ----------------------------------------------------------------------------
# Fused kernel: NB images per grid step.
# ----------------------------------------------------------------------------
def _dense_layer_kernel(x_ref, sb1_ref, w1_ref, b2_ref, w2p_ref, o_ref, *, H, W):
    """Per grid step:
         x_ref   : (NB, Cin, H*W)     f32
         sb1_ref : (Cin, 2)           f32   [:,0]=BN1 scale, [:,1]=BN1 bias
         w1_ref  : (Cmid, Cin)        MXU dtype (BN2 scale folded in)
         b2_ref  : (Cmid, 1)          f32   BN2 bias
         w2p_ref : (3, 3*Coutp, Cmid) MXU dtype, group ky -> rows (kx, cout)
         o_ref   : (NB, Coutp, H*W)   f32
    """
    NB = x_ref.shape[0]
    Coutp = o_ref.shape[1]
    HW = H * W
    mxu_dtype = w1_ref.dtype

    s1 = sb1_ref[:, 0:1]          # (Cin, 1)
    b1 = sb1_ref[:, 1:2]          # (Cin, 1)
    b2 = b2_ref[...]              # (Cmid, 1)

    # Boundary masks for the 8 non-center taps (built once per grid step).
    pos = lax.broadcasted_iota(jnp.int32, (Coutp, HW), 1)
    xv = (pos & (W - 1)) if (W & (W - 1)) == 0 else (pos % W)
    y_lo = pos >= W               # source row y-1 exists
    y_hi = pos < (H - 1) * W      # source row y+1 exists
    x_lo = xv >= 1                # source col x-1 exists
    x_hi = xv <= W - 2            # source col x+1 exists
    edge = {
        -1: {-1: jnp.logical_and(y_lo, x_lo), 0: y_lo,
             1: jnp.logical_and(y_lo, x_hi)},
        0: {-1: x_lo, 1: x_hi},
        1: {-1: jnp.logical_and(y_hi, x_lo), 0: y_hi,
            1: jnp.logical_and(y_hi, x_hi)},
    }

    for b in range(NB):           # NB is static -> fully unrolled
        # ---- BN1+ReLU -> 1x1 conv (BN2 scale folded) -> +bias2 + ReLU -------
        x = x_ref[b].astype(jnp.float32)                               # (Cin, HW)
        h = jnp.maximum(x * s1 + b1, 0.0)                              # f32 VPU
        y = jnp.dot(w1_ref[...], h.astype(mxu_dtype),
                    preferred_element_type=jnp.float32)                # (Cmid, HW)
        a = jnp.maximum(y + b2, 0.0).astype(mxu_dtype)                 # (Cmid, HW)

        # ---- 3x3 conv, pad=1: 3 ky-group matmuls, 9 rolled+masked taps ------
        acc = None
        for ky in (1, 0, 2):      # center row group first -> initializes acc
            dy = ky - 1
            pg = jnp.dot(w2p_ref[ky], a,
                         preferred_element_type=jnp.float32)           # (3*Coutp, HW)
            for kx in ((1, 0, 2) if ky == 1 else (0, 1, 2)):
                dx = kx - 1
                pt = pg[kx * Coutp:(kx + 1) * Coutp, :]                # aligned slice
                shift = dy * W + dx                                    # src offset
                if shift != 0:
                    # pt_shifted[:, p] == pt[:, p + shift]
                    pt = pltpu.roll(pt, shift=(-shift) % HW, axis=1)
                if dy != 0 or dx != 0:
                    pt = jnp.where(edge[dy][dx], pt, 0.0)              # conv zero-pad
                acc = pt if acc is None else acc + pt
        o_ref[b] = acc.astype(o_ref.dtype)                             # lane-dense


# ----------------------------------------------------------------------------
# Wrapper: NCHW in, NCHW out, no transposes.
# ----------------------------------------------------------------------------
def dense_layer_forward(x_nchw, params, *, images_per_step=None):
    N, Cin, H, W = x_nchw.shape
    HW = H * W
    Cmid = params["w1"].shape[0]
    Coutp = params["w2p"].shape[1] // 3
    Cout = params["cout"]
    # TODO(synk): spatial row tiling with +-1-row halos for H*W not a multiple
    #             of 128 / large images; whole-image blocks assumed here.
    assert HW % 128 == 0

    if images_per_step is None:
        # Fewest possible steps (overhead-bound regime) while keeping >= 2
        # balanced parallel steps so both v7x TensorCores get work.
        images_per_step = N // 2 if (N >= 2 and N % 2 == 0) else 1
    assert N % images_per_step == 0
    NB = images_per_step
    n_steps = N // NB

    x_flat = x_nchw.reshape(N, Cin, HW)            # free reshape, stays NCHW

    w_bytes = (params["w1"].size * params["w1"].dtype.itemsize
               + params["w2p"].size * params["w2p"].dtype.itemsize
               + params["sb1"].size * 4 + params["b2"].size * 4)
    cost = pl.CostEstimate(
        flops=2 * N * HW * Cmid * (Cin + 9 * Coutp),
        transcendentals=0,
        bytes_accessed=(x_flat.size + N * Coutp * HW) * 4 + w_bytes * n_steps,
    )

    kernel = functools.partial(_dense_layer_kernel, H=H, W=W)
    out = pl.pallas_call(
        kernel,
        out_shape=jax.ShapeDtypeStruct((N, Coutp, HW), jnp.float32),
        grid_spec=pltpu.PrefetchScalarGridSpec(
            num_scalar_prefetch=0,
            grid=(n_steps,),
            in_specs=[
                pl.BlockSpec((NB, Cin, HW), lambda n: (n, 0, 0)),
                pl.BlockSpec((Cin, 2), lambda n: (0, 0)),
                pl.BlockSpec((Cmid, Cin), lambda n: (0, 0)),
                pl.BlockSpec((Cmid, 1), lambda n: (0, 0)),
                pl.BlockSpec((3, 3 * Coutp, Cmid), lambda n: (0, 0, 0)),
            ],
            out_specs=pl.BlockSpec((NB, Coutp, HW), lambda n: (n, 0, 0)),
        ),
        compiler_params=pltpu.CompilerParams(
            dimension_semantics=("parallel",),
            vmem_limit_bytes=32 * 1024 * 1024,
        ),
        cost_estimate=cost,
    )(x_flat, params["sb1"], params["w1"], params["b2"], params["w2p"])

    if Coutp != Cout:
        out = out[:, :Cout, :]
    return out.reshape(N, Cout, H, W)


# ----------------------------------------------------------------------------
# Parameter folding / packing (done once, outside the kernel).
# ----------------------------------------------------------------------------
def prepare_params(raw, *, eps=1e-5, mxu_dtype=jnp.bfloat16):
    Cmid, Cin = raw["w1_t"].shape[:2]
    Cout = raw["w2_t"].shape[0]
    Coutp = -(-Cout // 8) * 8                       # pad to f32 sublane tile

    scale1 = raw["gamma1"] / jnp.sqrt(raw["var1"] + eps)
    bias1 = raw["beta1"] - raw["mean1"] * scale1
    scale2 = raw["gamma2"] / jnp.sqrt(raw["var2"] + eps)
    bias2 = raw["beta2"] - raw["mean2"] * scale2

    sb1 = jnp.stack([scale1, bias1], axis=1).astype(jnp.float32)          # (Cin, 2)
    w1 = (scale2[:, None] * raw["w1_t"][:, :, 0, 0]).astype(mxu_dtype)    # (Cmid, Cin)
    b2 = bias2.reshape(Cmid, 1).astype(jnp.float32)

    w2 = raw["w2_t"]
    if Coutp != Cout:
        w2 = jnp.pad(w2, ((0, Coutp - Cout), (0, 0), (0, 0), (0, 0)))
    # (Coutp, Cmid, 3, 3) -> (ky, kx, Coutp, Cmid) -> (3, 3*Coutp, Cmid)
    w2p = jnp.transpose(w2, (2, 3, 0, 1)).reshape(3, 3 * Coutp, Cmid)
    w2p = w2p.astype(mxu_dtype)

    return dict(sb1=sb1, w1=w1, b2=b2, w2p=w2p, cout=Cout)


# ----------------------------------------------------------------------------
# Pure-JAX reference (PyTorch eval semantics, NCHW / OIHW)
# ----------------------------------------------------------------------------
def ref_forward(x, raw, eps=1e-5):
    def bn(v, gamma, beta, mean, var):
        inv = gamma / jnp.sqrt(var + eps)
        return ((v - mean[None, :, None, None]) * inv[None, :, None, None]
                + beta[None, :, None, None])

    h = jnp.maximum(bn(x, raw["gamma1"], raw["beta1"],
                       raw["mean1"], raw["var1"]), 0.0)
    y = lax.conv_general_dilated(h, raw["w1_t"], (1, 1), "VALID",
                                 dimension_numbers=("NCHW", "OIHW", "NCHW"))
    a = jnp.maximum(bn(y, raw["gamma2"], raw["beta2"],
                       raw["mean2"], raw["var2"]), 0.0)
    out = lax.conv_general_dilated(a, raw["w2_t"], (1, 1), [(1, 1), (1, 1)],
                                   dimension_numbers=("NCHW", "OIHW", "NCHW"))
    return out


# ----------------------------------------------------------------------------
if __name__ == "__main__":
    # _DenseLayer(num_input_features=16, growth_rate=8, bn_size=4, drop_rate=0)
    Cin, growth_rate, bn_size = 16, 8, 4
    Cmid = bn_size * growth_rate          # 32
    Cout = growth_rate                    # 8
    N, H, W = 4, 16, 16
    eps = 1e-5

    key = jax.random.PRNGKey(0)
    ks = jax.random.split(key, 12)

    x = jax.random.normal(ks[0], (N, Cin, H, W), jnp.float32)
    raw = dict(
        gamma1=jax.random.uniform(ks[1], (Cin,), jnp.float32, 0.5, 1.5),
        beta1=0.1 * jax.random.normal(ks[2], (Cin,), jnp.float32),
        mean1=0.1 * jax.random.normal(ks[3], (Cin,), jnp.float32),
        var1=jax.random.uniform(ks[4], (Cin,), jnp.float32, 0.5, 1.5),
        w1_t=0.1 * jax.random.normal(ks[5], (Cmid, Cin, 1, 1), jnp.float32),
        gamma2=jax.random.uniform(ks[6], (Cmid,), jnp.float32, 0.5, 1.5),
        beta2=0.1 * jax.random.normal(ks[7], (Cmid,), jnp.float32),
        mean2=0.1 * jax.random.normal(ks[8], (Cmid,), jnp.float32),
        var2=jax.random.uniform(ks[9], (Cmid,), jnp.float32, 0.5, 1.5),
        w2_t=0.1 * jax.random.normal(ks[10], (Cout, Cmid, 3, 3), jnp.float32),
    )

    ref = jax.block_until_ready(ref_forward(x, raw, eps=eps))

    # Recommended perf config: bf16 operands at the MXU boundary, f32 accum.
    # Tolerance deliberately loosened for the bf16 cast.
    p_bf16 = prepare_params(raw, eps=eps, mxu_dtype=jnp.bfloat16)
    out_bf16 = jax.block_until_ready(dense_layer_forward(x, p_bf16))
    np.testing.assert_allclose(np.asarray(out_bf16), np.asarray(ref),
                               rtol=2e-2, atol=2e-2)

    # Full-f32 MXU path: matches the PyTorch eval reference tightly.
    p_f32 = prepare_params(raw, eps=eps, mxu_dtype=jnp.float32)
    out_f32 = jax.block_until_ready(dense_layer_forward(x, p_f32))
    np.testing.assert_allclose(np.asarray(out_f32), np.asarray(ref),
                               rtol=2e-3, atol=2e-3)

    assert out_bf16.shape == (N, Cout, H, W)
    print("KERNEL_OK")
</pallas_src>

<mosaic_0001>
module attributes {stable_mosaic.version = 11 : i64} {
  func.func @_dense_layer_kernel(%arg0: i32, %arg1: memref<2x16x256xf32, #tpu.memory_space<vmem>>, %arg2: memref<16x2xf32, #tpu.memory_space<vmem>>, %arg3: memref<32x16xbf16, #tpu.memory_space<vmem>>, %arg4: memref<32x1xf32, #tpu.memory_space<vmem>>, %arg5: memref<3x24x32xbf16, #tpu.memory_space<vmem>>, %arg6: memref<2x8x256xf32, #tpu.memory_space<vmem>>) attributes {dimension_semantics = [#tpu.dimension_semantics<parallel>], iteration_bounds = array<i64: 2>, scalar_prefetch = 0 : i64, scratch_operands = 0 : i64, tpu.core_type = #tpu.core_type<tc>, window_params = [{transform_indices = @transform_0, window_bounds = array<i64: 2, 16, 256>}, {pipeline_mode = #tpu.pipeline_mode<synchronous>, transform_indices = @transform_1, window_bounds = array<i64: 16, 2>}, {pipeline_mode = #tpu.pipeline_mode<synchronous>, transform_indices = @transform_2, window_bounds = array<i64: 32, 16>}, {pipeline_mode = #tpu.pipeline_mode<synchronous>, transform_indices = @transform_3, window_bounds = array<i64: 32, 1>}, {pipeline_mode = #tpu.pipeline_mode<synchronous>, transform_indices = @transform_4, window_bounds = array<i64: 3, 24, 32>}, {transform_indices = @transform_5, window_bounds = array<i64: 2, 8, 256>}]} {
    %c0 = arith.constant 0 : index
    %c0_0 = arith.constant 0 : index
    %0 = vector.load %arg2[%c0, %c0_0] : memref<16x2xf32, #tpu.memory_space<vmem>>, vector<16x1xf32>
    %c0_1 = arith.constant 0 : index
    %c1 = arith.constant 1 : index
    %1 = vector.load %arg2[%c0_1, %c1] : memref<16x2xf32, #tpu.memory_space<vmem>>, vector<16x1xf32>
    %c0_2 = arith.constant 0 : index
    %c0_3 = arith.constant 0 : index
    %2 = vector.load %arg4[%c0_2, %c0_3] : memref<32x1xf32, #tpu.memory_space<vmem>>, vector<32x1xf32>
    %3 = tpu.iota {dimensions = array<i32: 1>} : vector<8x256xi32>
    %c15_i32 = arith.constant 15 : i32
    %4 = vector.broadcast %c15_i32 : i32 to vector<8x256xi32>
    %5 = arith.andi %3, %4 : vector<8x256xi32>
    %c16_i32 = arith.constant 16 : i32
    %6 = vector.broadcast %c16_i32 : i32 to vector<8x256xi32>
    %7 = arith.cmpi sge, %3, %6 : vector<8x256xi32>
    %c240_i32 = arith.constant 240 : i32
    %8 = vector.broadcast %c240_i32 : i32 to vector<8x256xi32>
    %9 = arith.cmpi slt, %3, %8 : vector<8x256xi32>
    %c1_i32 = arith.constant 1 : i32
    %10 = vector.broadcast %c1_i32 : i32 to vector<8x256xi32>
    %11 = arith.cmpi sge, %5, %10 : vector<8x256xi32>
    %c14_i32 = arith.constant 14 : i32
    %12 = vector.broadcast %c14_i32 : i32 to vector<8x256xi32>
    %13 = arith.cmpi sle, %5, %12 : vector<8x256xi32>
    %14 = arith.andi %7, %11 : vector<8x256xi1>
    %15 = arith.andi %7, %13 : vector<8x256xi1>
    %16 = arith.andi %9, %11 : vector<8x256xi1>
    %17 = arith.andi %9, %13 : vector<8x256xi1>
    %c0_4 = arith.constant 0 : index
    %c0_5 = arith.constant 0 : index
    %c0_6 = arith.constant 0 : index
    %18 = vector.load %arg1[%c0_4, %c0_5, %c0_6] : memref<2x16x256xf32, #tpu.memory_space<vmem>>, vector<1x16x256xf32>
    %19 = vector.shape_cast %18 : vector<1x16x256xf32> to vector<16x256xf32>
    %20 = vector.broadcast %0 : vector<16x1xf32> to vector<16x256xf32>
    %21 = arith.mulf %19, %20 : vector<16x256xf32>
    %22 = vector.broadcast %1 : vector<16x1xf32> to vector<16x256xf32>
    %23 = arith.addf %21, %22 : vector<16x256xf32>
    %cst = arith.constant 0.000000e+00 : f32
    %24 = vector.broadcast %cst : f32 to vector<16x256xf32>
    %25 = arith.maximumf %23, %24 : vector<16x256xf32>
    %c0_7 = arith.constant 0 : index
    %c0_8 = arith.constant 0 : index
    %26 = vector.load %arg3[%c0_7, %c0_8] : memref<32x16xbf16, #tpu.memory_space<vmem>>, vector<32x16xbf16>
    %27 = arith.truncf %25 : vector<16x256xf32> to vector<16x256xbf16>
    %cst_9 = arith.constant dense<0.000000e+00> : vector<32x256xf32>
    %28 = tpu.matmul %26, %27, %cst_9 {dimension_numbers = #tpu.dot_dimension_numbers<[1], [0], [0], [1], [0, 0, 1, 1], [], []>} : vector<32x16xbf16>, vector<16x256xbf16>, vector<32x256xf32> -> vector<32x256xf32>
    %29 = vector.broadcast %2 : vector<32x1xf32> to vector<32x256xf32>
    %30 = arith.addf %28, %29 : vector<32x256xf32>
    %cst_10 = arith.constant 0.000000e+00 : f32
    %31 = vector.broadcast %cst_10 : f32 to vector<32x256xf32>
    %32 = arith.maximumf %30, %31 : vector<32x256xf32>
    %33 = arith.truncf %32 : vector<32x256xf32> to vector<32x256xbf16>
    %c1_11 = arith.constant 1 : index
    %c0_12 = arith.constant 0 : index
    %c0_13 = arith.constant 0 : index
    %34 = vector.load %arg5[%c1_11, %c0_12, %c0_13] : memref<3x24x32xbf16, #tpu.memory_space<vmem>>, vector<1x24x32xbf16>
    %35 = vector.shape_cast %34 : vector<1x24x32xbf16> to vector<24x32xbf16>
    %cst_14 = arith.constant dense<0.000000e+00> : vector<24x256xf32>
    %36 = tpu.matmul %35, %33, %cst_14 {dimension_numbers = #tpu.dot_dimension_numbers<[1], [0], [0], [1], [0, 0, 1, 1], [], []>} : vector<24x32xbf16>, vector<32x256xbf16>, vector<24x256xf32> -> vector<24x256xf32>
    %37 = vector.extract_strided_slice %36 {offsets = [8, 0], sizes = [8, 256], strides = [1, 1]} : vector<24x256xf32> to vector<8x256xf32>
    %38 = vector.extract_strided_slice %36 {offsets = [0, 0], sizes = [8, 256], strides = [1, 1]} : vector<24x256xf32> to vector<8x256xf32>
    %c1_i32_15 = arith.constant 1 : i32
    %39 = tpu.dynamic_rotate %38 by %c1_i32_15 dim 1 : vector<8x256xf32>, i32 -> vector<8x256xf32>
    %cst_16 = arith.constant 0.000000e+00 : f32
    %40 = vector.broadcast %cst_16 : f32 to vector<8x256xf32>
    %41 = arith.select %11, %39, %40 : vector<8x256xi1>, vector<8x256xf32>
    %42 = arith.addf %37, %41 : vector<8x256xf32>
    %43 = vector.extract_strided_slice %36 {offsets = [16, 0], sizes = [8, 256], strides = [1, 1]} : vector<24x256xf32> to vector<8x256xf32>
    %c255_i32 = arith.constant 255 : i32
    %44 = tpu.dynamic_rotate %43 by %c255_i32 dim 1 : vector<8x256xf32>, i32 -> vector<8x256xf32>
    %cst_17 = arith.constant 0.000000e+00 : f32
    %45 = vector.broadcast %cst_17 : f32 to vector<8x256xf32>
    %46 = arith.select %13, %44, %45 : vector<8x256xi1>, vector<8x256xf32>
    %47 = arith.addf %42, %46 : vector<8x256xf32>
    %c0_18 = arith.constant 0 : index
    %c0_19 = arith.constant 0 : index
    %c0_20 = arith.constant 0 : index
    %48 = vector.load %arg5[%c0_18, %c0_19, %c0_20] : memref<3x24x32xbf16, #tpu.memory_space<vmem>>, vector<1x24x32xbf16>
    %49 = vector.shape_cast %48 : vector<1x24x32xbf16> to vector<24x32xbf16>
    %cst_21 = arith.constant dense<0.000000e+00> : vector<24x256xf32>
    %50 = tpu.matmul %49, %33, %cst_21 {dimension_numbers = #tpu.dot_dimension_numbers<[1], [0], [0], [1], [0, 0, 1, 1], [], []>} : vector<24x32xbf16>, vector<32x256xbf16>, vector<24x256xf32> -> vector<24x256xf32>
    %51 = vector.extract_strided_slice %50 {offsets = [0, 0], sizes = [8, 256], strides = [1, 1]} : vector<24x256xf32> to vector<8x256xf32>
    %c17_i32 = arith.constant 17 : i32
    %52 = tpu.dynamic_rotate %51 by %c17_i32 dim 1 : vector<8x256xf32>, i32 -> vector<8x256xf32>
    %cst_22 = arith.constant 0.000000e+00 : f32
    %53 = vector.broadcast %cst_22 : f32 to vector<8x256xf32>
    %54 = arith.select %14, %52, %53 : vector<8x256xi1>, vector<8x256xf32>
    %55 = arith.addf %47, %54 : vector<8x256xf32>
    %56 = vector.extract_strided_slice %50 {offsets = [8, 0], sizes = [8, 256], strides = [1, 1]} : vector<24x256xf32> to vector<8x256xf32>
    %c16_i32_23 = arith.constant 16 : i32
    %57 = tpu.dynamic_rotate %56 by %c16_i32_23 dim 1 : vector<8x256xf32>, i32 -> vector<8x256xf32>
    %cst_24 = arith.constant 0.000000e+00 : f32
    %58 = vector.broadcast %cst_24 : f32 to vector<8x256xf32>
    %59 = arith.select %7, %57, %58 : vector<8x256xi1>, vector<8x256xf32>
    %60 = arith.addf %55, %59 : vector<8x256xf32>
    %61 = vector.extract_strided_slice %50 {offsets = [16, 0], sizes = [8, 256], strides = [1, 1]} : vector<24x256xf32> to vector<8x256xf32>
    %c15_i32_25 = arith.constant 15 : i32
    %62 = tpu.dynamic_rotate %61 by %c15_i32_25 dim 1 : vector<8x256xf32>, i32 -> vector<8x256xf32>
    %cst_26 = arith.constant 0.000000e+00 : f32
    %63 = vector.broadcast %cst_26 : f32 to vector<8x256xf32>
    %64 = arith.select %15, %62, %63 : vector<8x256xi1>, vector<8x256xf32>
    %65 = arith.addf %60, %64 : vector<8x256xf32>
    %c2 = arith.constant 2 : index
    %c0_27 = arith.constant 0 : index
    %c0_28 = arith.constant 0 : index
    %66 = vector.load %arg5[%c2, %c0_27, %c0_28] : memref<3x24x32xbf16, #tpu.memory_space<vmem>>, vector<1x24x32xbf16>
    %67 = vector.shape_cast %66 : vector<1x24x32xbf16> to vector<24x32xbf16>
    %cst_29 = arith.constant dense<0.000000e+00> : vector<24x256xf32>
    %68 = tpu.matmul %67, %33, %cst_29 {dimension_numbers = #tpu.dot_dimension_numbers<[1], [0], [0], [1], [0, 0, 1, 1], [], []>} : vector<24x32xbf16>, vector<32x256xbf16>, vector<24x256xf32> -> vector<24x256xf32>
    %69 = vector.extract_strided_slice %68 {offsets = [0, 0], sizes = [8, 256], strides = [1, 1]} : vector<24x256xf32> to vector<8x256xf32>
    %c241_i32 = arith.constant 241 : i32
    %70 = tpu.dynamic_rotate %69 by %c241_i32 dim 1 : vector<8x256xf32>, i32 -> vector<8x256xf32>
    %cst_30 = arith.constant 0.000000e+00 : f32
    %71 = vector.broadcast %cst_30 : f32 to vector<8x256xf32>
    %72 = arith.select %16, %70, %71 : vector<8x256xi1>, vector<8x256xf32>
    %73 = arith.addf %65, %72 : vector<8x256xf32>
    %74 = vector.extract_strided_slice %68 {offsets = [8, 0], sizes = [8, 256], strides = [1, 1]} : vector<24x256xf32> to vector<8x256xf32>
    %c240_i32_31 = arith.constant 240 : i32
    %75 = tpu.dynamic_rotate %74 by %c240_i32_31 dim 1 : vector<8x256xf32>, i32 -> vector<8x256xf32>
    %cst_32 = arith.constant 0.000000e+00 : f32
    %76 = vector.broadcast %cst_32 : f32 to vector<8x256xf32>
    %77 = arith.select %9, %75, %76 : vector<8x256xi1>, vector<8x256xf32>
    %78 = arith.addf %73, %77 : vector<8x256xf32>
    %79 = vector.extract_strided_slice %68 {offsets = [16, 0], sizes = [8, 256], strides = [1, 1]} : vector<24x256xf32> to vector<8x256xf32>
    %c239_i32 = arith.constant 239 : i32
    %80 = tpu.dynamic_rotate %79 by %c239_i32 dim 1 : vector<8x256xf32>, i32 -> vector<8x256xf32>
    %cst_33 = arith.constant 0.000000e+00 : f32
    %81 = vector.broadcast %cst_33 : f32 to vector<8x256xf32>
    %82 = arith.select %17, %80, %81 : vector<8x256xi1>, vector<8x256xf32>
    %83 = arith.addf %78, %82 : vector<8x256xf32>
    %c0_34 = arith.constant 0 : index
    %c0_35 = arith.constant 0 : index
    %c0_36 = arith.constant 0 : index
    %84 = vector.load %arg6[%c0_34, %c0_35, %c0_36] : memref<2x8x256xf32, #tpu.memory_space<vmem>>, vector<1x8x256xf32>
    %85 = vector.shape_cast %84 : vector<1x8x256xf32> to vector<8x256xf32>
    %86 = vector.shape_cast %83 : vector<8x256xf32> to vector<1x8x256xf32>
    tpu.vector_store %arg6[%c0_34, %c0_35, %c0_36], %86 {strides = array<i32>} : memref<2x8x256xf32, #tpu.memory_space<vmem>>, vector<1x8x256xf32>,
    %c1_37 = arith.constant 1 : index
    %c0_38 = arith.constant 0 : index
    %c0_39 = arith.constant 0 : index
    %87 = vector.load %arg1[%c1_37, %c0_38, %c0_39] : memref<2x16x256xf32, #tpu.memory_space<vmem>>, vector<1x16x256xf32>
    %88 = vector.shape_cast %87 : vector<1x16x256xf32> to vector<16x256xf32>
    %89 = vector.broadcast %0 : vector<16x1xf32> to vector<16x256xf32>
    %90 = arith.mulf %88, %89 : vector<16x256xf32>
    %91 = vector.broadcast %1 : vector<16x1xf32> to vector<16x256xf32>
    %92 = arith.addf %90, %91 : vector<16x256xf32>
    %cst_40 = arith.constant 0.000000e+00 : f32
    %93 = vector.broadcast %cst_40 : f32 to vector<16x256xf32>
    %94 = arith.maximumf %92, %93 : vector<16x256xf32>
    %c0_41 = arith.constant 0 : index
    %c0_42 = arith.constant 0 : index
    %95 = vector.load %arg3[%c0_41, %c0_42] : memref<32x16xbf16, #tpu.memory_space<vmem>>, vector<32x16xbf16>
    %96 = arith.truncf %94 : vector<16x256xf32> to vector<16x256xbf16>
    %cst_43 = arith.constant dense<0.000000e+00> : vector<32x256xf32>
    %97 = tpu.matmul %95, %96, %cst_43 {dimension_numbers = #tpu.dot_dimension_numbers<[1], [0], [0], [1], [0, 0, 1, 1], [], []>} : vector<32x16xbf16>, vector<16x256xbf16>, vector<32x256xf32> -> vector<32x256xf32>
    %98 = vector.broadcast %2 : vector<32x1xf32> to vector<32x256xf32>
    %99 = arith.addf %97, %98 : vector<32x256xf32>
    %cst_44 = arith.constant 0.000000e+00 : f32
    %100 = vector.broadcast %cst_44 : f32 to vector<32x256xf32>
    %101 = arith.maximumf %99, %100 : vector<32x256xf32>
    %102 = arith.truncf %101 : vector<32x256xf32> to vector<32x256xbf16>
    %c1_45 = arith.constant 1 : index
    %c0_46 = arith.constant 0 : index
    %c0_47 = arith.constant 0 : index
    %103 = vector.load %arg5[%c1_45, %c0_46, %c0_47] : memref<3x24x32xbf16, #tpu.memory_space<vmem>>, vector<1x24x32xbf16>
    %104 = vector.shape_cast %103 : vector<1x24x32xbf16> to vector<24x32xbf16>
    %cst_48 = arith.constant dense<0.000000e+00> : vector<24x256xf32>
    %105 = tpu.matmul %104, %102, %cst_48 {dimension_numbers = #tpu.dot_dimension_numbers<[1], [0], [0], [1], [0, 0, 1, 1], [], []>} : vector<24x32xbf16>, vector<32x256xbf16>, vector<24x256xf32> -> vector<24x256xf32>
    %106 = vector.extract_strided_slice %105 {offsets = [8, 0], sizes = [8, 256], strides = [1, 1]} : vector<24x256xf32> to vector<8x256xf32>
    %107 = vector.extract_strided_slice %105 {offsets = [0, 0], sizes = [8, 256], strides = [1, 1]} : vector<24x256xf32> to vector<8x256xf32>
    %c1_i32_49 = arith.constant 1 : i32
    %108 = tpu.dynamic_rotate %107 by %c1_i32_49 dim 1 : vector<8x256xf32>, i32 -> vector<8x256xf32>
    %cst_50 = arith.constant 0.000000e+00 : f32
    %109 = vector.broadcast %cst_50 : f32 to vector<8x256xf32>
    %110 = arith.select %11, %108, %109 : vector<8x256xi1>, vector<8x256xf32>
    %111 = arith.addf %106, %110 : vector<8x256xf32>
    %112 = vector.extract_strided_slice %105 {offsets = [16, 0], sizes = [8, 256], strides = [1, 1]} : vector<24x256xf32> to vector<8x256xf32>
    %c255_i32_51 = arith.constant 255 : i32
    %113 = tpu.dynamic_rotate %112 by %c255_i32_51 dim 1 : vector<8x256xf32>, i32 -> vector<8x256xf32>
    %cst_52 = arith.constant 0.000000e+00 : f32
    %114 = vector.broadcast %cst_52 : f32 to vector<8x256xf32>
    %115 = arith.select %13, %113, %114 : vector<8x256xi1>, vector<8x256xf32>
    %116 = arith.addf %111, %115 : vector<8x256xf32>
    %c0_53 = arith.constant 0 : index
    %c0_54 = arith.constant 0 : index
    %c0_55 = arith.constant 0 : index
    %117 = vector.load %arg5[%c0_53, %c0_54, %c0_55] : memref<3x24x32xbf16, #tpu.memory_space<vmem>>, vector<1x24x32xbf16>
    %118 = vector.shape_cast %117 : vector<1x24x32xbf16> to vector<24x32xbf16>
    %cst_56 = arith.constant dense<0.000000e+00> : vector<24x256xf32>
    %119 = tpu.matmul %118, %102, %cst_56 {dimension_numbers = #tpu.dot_dimension_numbers<[1], [0], [0], [1], [0, 0, 1, 1], [], []>} : vector<24x32xbf16>, vector<32x256xbf16>, vector<24x256xf32> -> vector<24x256xf32>
    %120 = vector.extract_strided_slice %119 {offsets = [0, 0], sizes = [8, 256], strides = [1, 1]} : vector<24x256xf32> to vector<8x256xf32>
    %c17_i32_57 = arith.constant 17 : i32
    %121 = tpu.dynamic_rotate %120 by %c17_i32_57 dim 1 : vector<8x256xf32>, i32 -> vector<8x256xf32>
    %cst_58 = arith.constant 0.000000e+00 : f32
    %122 = vector.broadcast %cst_58 : f32 to vector<8x256xf32>
    %123 = arith.select %14, %121, %122 : vector<8x256xi1>, vector<8x256xf32>
    %124 = arith.addf %116, %123 : vector<8x256xf32>
    %125 = vector.extract_strided_slice %119 {offsets = [8, 0], sizes = [8, 256], strides = [1, 1]} : vector<24x256xf32> to vector<8x256xf32>
    %c16_i32_59 = arith.constant 16 : i32
    %126 = tpu.dynamic_rotate %125 by %c16_i32_59 dim 1 : vector<8x256xf32>, i32 -> vector<8x256xf32>
    %cst_60 = arith.constant 0.000000e+00 : f32
    %127 = vector.broadcast %cst_60 : f32 to vector<8x256xf32>
    %128 = arith.select %7, %126, %127 : vector<8x256xi1>, vector<8x256xf32>
    %129 = arith.addf %124, %128 : vector<8x256xf32>
    %130 = vector.extract_strided_slice %119 {offsets = [16, 0], sizes = [8, 256], strides = [1, 1]} : vector<24x256xf32> to vector<8x256xf32>
    %c15_i32_61 = arith.constant 15 : i32
    %131 = tpu.dynamic_rotate %130 by %c15_i32_61 dim 1 : vector<8x256xf32>, i32 -> vector<8x256xf32>
    %cst_62 = arith.constant 0.000000e+00 : f32
    %132 = vector.broadcast %cst_62 : f32 to vector<8x256xf32>
    %133 = arith.select %15, %131, %132 : vector<8x256xi1>, vector<8x256xf32>
    %134 = arith.addf %129, %133 : vector<8x256xf32>
    %c2_63 = arith.constant 2 : index
    %c0_64 = arith.constant 0 : index
    %c0_65 = arith.constant 0 : index
    %135 = vector.load %arg5[%c2_63, %c0_64, %c0_65] : memref<3x24x32xbf16, #tpu.memory_space<vmem>>, vector<1x24x32xbf16>
    %136 = vector.shape_cast %135 : vector<1x24x32xbf16> to vector<24x32xbf16>
    %cst_66 = arith.constant dense<0.000000e+00> : vector<24x256xf32>
    %137 = tpu.matmul %136, %102, %cst_66 {dimension_numbers = #tpu.dot_dimension_numbers<[1], [0], [0], [1], [0, 0, 1, 1], [], []>} : vector<24x32xbf16>, vector<32x256xbf16>, vector<24x256xf32> -> vector<24x256xf32>
    %138 = vector.extract_strided_slice %137 {offsets = [0, 0], sizes = [8, 256], strides = [1, 1]} : vector<24x256xf32> to vector<8x256xf32>
    %c241_i32_67 = arith.constant 241 : i32
    %139 = tpu.dynamic_rotate %138 by %c241_i32_67 dim 1 : vector<8x256xf32>, i32 -> vector<8x256xf32>
    %cst_68 = arith.constant 0.000000e+00 : f32
    %140 = vector.broadcast %cst_68 : f32 to vector<8x256xf32>
    %141 = arith.select %16, %139, %140 : vector<8x256xi1>, vector<8x256xf32>
    %142 = arith.addf %134, %141 : vector<8x256xf32>
    %143 = vector.extract_strided_slice %137 {offsets = [8, 0], sizes = [8, 256], strides = [1, 1]} : vector<24x256xf32> to vector<8x256xf32>
    %c240_i32_69 = arith.constant 240 : i32
    %144 = tpu.dynamic_rotate %143 by %c240_i32_69 dim 1 : vector<8x256xf32>, i32 -> vector<8x256xf32>
    %cst_70 = arith.constant 0.000000e+00 : f32
    %145 = vector.broadcast %cst_70 : f32 to vector<8x256xf32>
    %146 = arith.select %9, %144, %145 : vector<8x256xi1>, vector<8x256xf32>
    %147 = arith.addf %142, %146 : vector<8x256xf32>
    %148 = vector.extract_strided_slice %137 {offsets = [16, 0], sizes = [8, 256], strides = [1, 1]} : vector<24x256xf32> to vector<8x256xf32>
    %c239_i32_71 = arith.constant 239 : i32
    %149 = tpu.dynamic_rotate %148 by %c239_i32_71 dim 1 : vector<8x256xf32>, i32 -> vector<8x256xf32>
    %cst_72 = arith.constant 0.000000e+00 : f32
    %150 = vector.broadcast %cst_72 : f32 to vector<8x256xf32>
    %151 = arith.select %17, %149, %150 : vector<8x256xi1>, vector<8x256xf32>
    %152 = arith.addf %147, %151 : vector<8x256xf32>
    %c1_73 = arith.constant 1 : index
    %c0_74 = arith.constant 0 : index
    %c0_75 = arith.constant 0 : index
    %153 = vector.load %arg6[%c1_73, %c0_74, %c0_75] : memref<2x8x256xf32, #tpu.memory_space<vmem>>, vector<1x8x256xf32>
    %154 = vector.shape_cast %153 : vector<1x8x256xf32> to vector<8x256xf32>
    %155 = vector.shape_cast %152 : vector<8x256xf32> to vector<1x8x256xf32>
    tpu.vector_store %arg6[%c1_73, %c0_74, %c0_75], %155 {strides = array<i32>} : memref<2x8x256xf32, #tpu.memory_space<vmem>>, vector<1x8x256xf32>,
    return
  }
  func.func @transform_0(%arg0: i32) -> (i32, i32, i32) {
    %c0_i32 = arith.constant 0 : i32
    %c0_i32_0 = arith.constant 0 : i32
    %c0_i32_1 = arith.constant 0 : i32
    return %arg0, %c0_i32, %c0_i32_0 : i32, i32, i32
  }
  func.func @transform_1(%arg0: i32) -> (i32, i32) {
    %c0_i32 = arith.constant 0 : i32
    %c0_i32_0 = arith.constant 0 : i32
    %c0_i32_1 = arith.constant 0 : i32
    return %c0_i32, %c0_i32_0 : i32, i32
  }
  func.func @transform_2(%arg0: i32) -> (i32, i32) {
    %c0_i32 = arith.constant 0 : i32
    %c0_i32_0 = arith.constant 0 : i32
    %c0_i32_1 = arith.constant 0 : i32
    return %c0_i32, %c0_i32_0 : i32, i32
  }
  func.func @transform_3(%arg0: i32) -> (i32, i32) {
    %c0_i32 = arith.constant 0 : i32
    %c0_i32_0 = arith.constant 0 : i32
    %c0_i32_1 = arith.constant 0 : i32
    return %c0_i32, %c0_i32_0 : i32, i32
  }
  func.func @transform_4(%arg0: i32) -> (i32, i32, i32) {
    %c0_i32 = arith.constant 0 : i32
    %c0_i32_0 = arith.constant 0 : i32
    %c0_i32_1 = arith.constant 0 : i32
    %c0_i32_2 = arith.constant 0 : i32
    return %c0_i32, %c0_i32_0, %c0_i32_1 : i32, i32, i32
  }
  func.func @transform_5(%arg0: i32) -> (i32, i32, i32) {
    %c0_i32 = arith.constant 0 : i32
    %c0_i32_0 = arith.constant 0 : i32
    %c0_i32_1 = arith.constant 0 : i32
    return %arg0, %c0_i32, %c0_i32_0 : i32, i32, i32
  }
}

</mosaic_0001>

<llo_original>
// kernel: tpu_custom_call.1
$region0: #{tpu_custom_call.1}
  #allocation0 [shape = 'u32[]', space=smem, size = 0x4, offset = 0x4, fixed_abs, tag = 'smem constant byte address 0x4 - core index']
  #allocation1 [shape = 'u32[144,128]{1,0:T(1,128)}', space=vmem, size = 0x12000, scoped, tag = 'internal scratch']
  %s0 = inlined_call_operand.hbm [shape: f32[4,16,256], index: 0, kind: input, shape index: {}]
  %s1 = inlined_call_operand.vmem [shape: f32[16,2], index: 1, kind: input, shape index: {}]
  %s2 = inlined_call_operand.vmem [shape: bf16[32,16], index: 2, kind: input, shape index: {}]
  %s3 = inlined_call_operand.vmem [shape: f32[32,1], index: 3, kind: input, shape index: {}]
  %s4 = inlined_call_operand.vmem [shape: bf16[3,24,32], index: 4, kind: input, shape index: {}]
  %s5 = inlined_call_operand.hbm [shape: f32[4,8,256], index: 5, kind: output, shape index: {}]
  %s6 = sld [smem:[#allocation0]]
  $region57: #{tpu_custom_call.1} parent=0
    _
  %s8 = ssub.s32 1, %s6
  %s9 = scalar_select 0, %s8, %s6
  $region1: #{tpu_custom_call.1} parent=0
    #allocation2 [shape = 'u8[65536]{0}', space=vmem, size = 0x10000, scoped, tag = 'input window, operand 0']
    #allocation3 [shape = 's32[2]{0}', space=sflag, size = 0x8, scoped, tag = 'scoped memory for tpu_custom_call.1']
    #allocation4 [shape = 's32[2]{0}', space=sflag, size = 0x8, scoped, tag = 'scoped memory for tpu_custom_call.1']
    #allocation5 [shape = 'u8[32768]{0}', space=vmem, size = 0x8000, scoped, tag = 'output window, operand 0']
    %10 = vsyncpa [#allocation3], 0
    %s11 = scalar_lea.sflag [#allocation3], 1
    %12 = vsyncpa %s11, 0
    %13 = vsyncpa [#allocation4], 0
    %s14 = scalar_lea.sflag [#allocation4], 1
    %15 = vsyncpa %s14, 0
    loop: start=0, step=1, limit=4
    $region2: #{tpu_custom_call.1} parent=1 // loop_pre_header
      _
    $region3: #{tpu_custom_call.1} parent=1 // loop_header
      %s17 = sphi 0, %s21
      %p18 = scmp.ge.s32.totalorder %s17, 4
      %s27 = sphi 0, %s29
      %s30 = sphi 0, %s27
      %s31 = sphi 0, %s30
      %s47 = sphi 0, %s31
      %s51 = sphi 0, %s51
      %s53 = sphi 0, %s51
      %s54 = sphi 0, %s53
      %s68 = sphi 0, %s54
      %s72 = sphi 0, %s72
      %s74 = sphi 0, %s72
      %s75 = sphi 0, %s74
      %s89 = sphi 0, %s75
      %s93 = sphi 0, %s93
      %s95 = sphi 0, %s93
      %s96 = sphi 0, %s95
      %s110 = sphi 0, %s96
      %s114 = sphi 0, %s114
      %s116 = sphi 0, %s114
      %s117 = sphi 0, %s116
      %s131 = sphi 0, %s117
      %s137 = sphi 0, %s139
      %s140 = sphi 0, %s137
      %s141 = sphi 0, %s140
      %s157 = sphi 0, %s141
    $region4: #{tpu_custom_call.1} parent=1 // loop_header_branch
      %20 = sbr.rel (%p18) target = $region8
    $region5: #{tpu_custom_call.1} parent=1 // loop_body
      %s22 = ssub.s32 %s17, 1
      %s23 = ssub.s32 %s17, 2
      %s24 = sadd.s32 %s17, 1
      %s25 = ssub.s32 %s17, %s24
      %p26 = scmp.eq.s32.totalorder %s25, 0
      %s28 = sadd.s32 %s27, 1
      %s29 = scalar_select %p26, %s27, %s28
      %p32 = pneg %p26
      %p33 = scmp.eq.s32.totalorder %s17, 1
      %p34 = por %p32, %p33
      %p35 = scmp.ne.s32.totalorder %s27, %s30
      %p36 = scmp.eq.s32.totalorder %s17, 0
      %p37 = por %p35, %p36
      %p38 = scmp.ne.s32.totalorder %s27, %s30
      %p39 = scmp.eq.s32.totalorder %s22, 1
      %p40 = por %p38, %p39
      %p41 = scmp.ne.s32.totalorder %s30, %s31
      %p42 = scmp.eq.s32.totalorder %s22, 0
      %p43 = por %p41, %p42
      %p44 = scmp.ne.s32.totalorder %s30, %s31
      %p45 = scmp.eq.s32.totalorder %s23, 1
      %p46 = por %p44, %p45
      %p48 = scmp.ne.s32.totalorder %s31, %s47
      %p49 = scmp.eq.s32.totalorder %s23, 0
      %p50 = por %p48, %p49
      %s52 = sadd.s32 %s51, 1
      %p55 = scmp.eq.s32.totalorder %s17, 1
      %p56 = scmp.ne.s32.totalorder %s51, %s53
      %p57 = scmp.eq.s32.totalorder %s17, 0
      %p58 = por %p56, %p57
      %p59 = scmp.ne.s32.totalorder %s51, %s53
      %p60 = scmp.eq.s32.totalorder %s22, 1
      %p61 = por %p59, %p60
      %p62 = scmp.ne.s32.totalorder %s53, %s54
      %p63 = scmp.eq.s32.totalorder %s22, 0
      %p64 = por %p62, %p63
      %p65 = scmp.ne.s32.totalorder %s53, %s54
      %p66 = scmp.eq.s32.totalorder %s23, 1
      %p67 = por %p65, %p66
      %p69 = scmp.ne.s32.totalorder %s54, %s68
      %p70 = scmp.eq.s32.totalorder %s23, 0
      %p71 = por %p69, %p70
      %s73 = sadd.s32 %s72, 1
      %p76 = scmp.eq.s32.totalorder %s17, 1
      %p77 = scmp.ne.s32.totalorder %s72, %s74
      %p78 = scmp.eq.s32.totalorder %s17, 0
      %p79 = por %p77, %p78
      %p80 = scmp.ne.s32.totalorder %s72, %s74
      %p81 = scmp.eq.s32.totalorder %s22, 1
      %p82 = por %p80, %p81
      %p83 = scmp.ne.s32.totalorder %s74, %s75
      %p84 = scmp.eq.s32.totalorder %s22, 0
      %p85 = por %p83, %p84
      %p86 = scmp.ne.s32.totalorder %s74, %s75
      %p87 = scmp.eq.s32.totalorder %s23, 1
      %p88 = por %p86, %p87
      %p90 = scmp.ne.s32.totalorder %s75, %s89
      %p91 = scmp.eq.s32.totalorder %s23, 0
      %p92 = por %p90, %p91
      %s94 = sadd.s32 %s93, 1
      %p97 = scmp.eq.s32.totalorder %s17, 1
      %p98 = scmp.ne.s32.totalorder %s93, %s95
      %p99 = scmp.eq.s32.totalorder %s17, 0
      %p100 = por %p98, %p99
      %p101 = scmp.ne.s32.totalorder %s93, %s95
      %p102 = scmp.eq.s32.totalorder %s22, 1
      %p103 = por %p101, %p102
      %p104 = scmp.ne.s32.totalorder %s95, %s96
      %p105 = scmp.eq.s32.totalorder %s22, 0
      %p106 = por %p104, %p105
      %p107 = scmp.ne.s32.totalorder %s95, %s96
      %p108 = scmp.eq.s32.totalorder %s23, 1
      %p109 = por %p107, %p108
      %p111 = scmp.ne.s32.totalorder %s96, %s110
      %p112 = scmp.eq.s32.totalorder %s23, 0
      %p113 = por %p111, %p112
      %s115 = sadd.s32 %s114, 1
      %p118 = scmp.eq.s32.totalorder %s17, 1
      %p119 = scmp.ne.s32.totalorder %s114, %s116
      %p120 = scmp.eq.s32.totalorder %s17, 0
      %p121 = por %p119, %p120
      %p122 = scmp.ne.s32.totalorder %s114, %s116
      %p123 = scmp.eq.s32.totalorder %s22, 1
      %p124 = por %p122, %p123
      %p125 = scmp.ne.s32.totalorder %s116, %s117
      %p126 = scmp.eq.s32.totalorder %s22, 0
      %p127 = por %p125, %p126
      %p128 = scmp.ne.s32.totalorder %s116, %s117
      %p129 = scmp.eq.s32.totalorder %s23, 1
      %p130 = por %p128, %p129
      %p132 = scmp.ne.s32.totalorder %s117, %s131
      %p133 = scmp.eq.s32.totalorder %s23, 0
      %p134 = por %p132, %p133
      %s135 = ssub.s32 %s17, %s24
      %p136 = scmp.eq.s32.totalorder %s135, 0
      %s138 = sadd.s32 %s137, 1
      %s139 = scalar_select %p136, %s137, %s138
      %p142 = pneg %p136
      %p143 = scmp.eq.s32.totalorder %s17, 1
      %p144 = por %p142, %p143
      %p145 = scmp.ne.s32.totalorder %s137, %s140
      %p146 = scmp.eq.s32.totalorder %s17, 0
      %p147 = por %p145, %p146
      %p148 = scmp.ne.s32.totalorder %s137, %s140
      %p149 = scmp.eq.s32.totalorder %s22, 1
      %p150 = por %p148, %p149
      %p151 = scmp.ne.s32.totalorder %s140, %s141
      %p152 = scmp.eq.s32.totalorder %s22, 0
      %p153 = por %p151, %p152
      %p154 = scmp.ne.s32.totalorder %s140, %s141
      %p155 = scmp.eq.s32.totalorder %s23, 1
      %p156 = por %p154, %p155
      %p158 = scmp.ne.s32.totalorder %s141, %s157
      %p159 = scmp.eq.s32.totalorder %s23, 0
      %p160 = por %p158, %p159
      %p161 = scmp.le.s32.totalorder 1, %s17
      %p162 = scmp.lt.s32.totalorder %s17, 3
      %p163 = pnand %p161, %p162
      %p164 = pneg %p163
      // Predicated region
      $region9: #{tpu_custom_call.1} parent=5 // pred_check
        _
      $region10: #{tpu_custom_call.1} parent=5 // pred_check_branch
        %166 = sbr.rel (%p163) target = $region12
      $region11: #{tpu_custom_call.1} parent=5 // pred_region
        %s167 = ssub.s32 %s17, 1
        // Predicated region
        $region13: #{tpu_custom_call.1} parent=11 // pred_check
          %p168 = pneg %p64
        $region14: #{tpu_custom_call.1} parent=11 // pred_check_branch
          %170 = sbr.rel (%p168) target = $region16
        $region15: #{tpu_custom_call.1} parent=11 // pred_region
          _
        $region16: #{tpu_custom_call.1} parent=11 // pred_fallthru
          _
        // Predicated region
        $region17: #{tpu_custom_call.1} parent=11 // pred_check
          %p171 = pneg %p85
        $region18: #{tpu_custom_call.1} parent=11 // pred_check_branch
          %173 = sbr.rel (%p171) target = $region20
        $region19: #{tpu_custom_call.1} parent=11 // pred_region
          _
        $region20: #{tpu_custom_call.1} parent=11 // pred_fallthru
          _
        // Predicated region
        $region21: #{tpu_custom_call.1} parent=11 // pred_check
          %p174 = pneg %p106
        $region22: #{tpu_custom_call.1} parent=11 // pred_check_branch
          %176 = sbr.rel (%p174) target = $region24
        $region23: #{tpu_custom_call.1} parent=11 // pred_region
          _
        $region24: #{tpu_custom_call.1} parent=11 // pred_fallthru
          _
        // Predicated region
        $region25: #{tpu_custom_call.1} parent=11 // pred_check
          %p177 = pneg %p127
        $region26: #{tpu_custom_call.1} parent=11 // pred_check_branch
          %179 = sbr.rel (%p177) target = $region28
        $region27: #{tpu_custom_call.1} parent=11 // pred_region
          _
        $region28: #{tpu_custom_call.1} parent=11 // pred_fallthru
          _
      $region12: #{tpu_custom_call.1} parent=5 // pred_fallthru
        _
      %p180 = scmp.lt.s32.totalorder %s17, 2
      // Predicated region
      $region29: #{tpu_custom_call.1} parent=5 // pred_check
        %p181 = pneg %p180
      $region30: #{tpu_custom_call.1} parent=5 // pred_check_branch
        %183 = sbr.rel (%p181) target = $region32
      $region31: #{tpu_custom_call.1} parent=5 // pred_region
        // Predicated region
        $region33: #{tpu_custom_call.1} parent=31 // pred_check
          %p184 = pneg %p37
        $region34: #{tpu_custom_call.1} parent=31 // pred_check_branch
          %186 = sbr.rel (%p184) target = $region36
        $region35: #{tpu_custom_call.1} parent=31 // pred_region
          %s187 = sand.u32 %s27, 1
          %s188 = scalar_lea.sflag [#allocation3], %s187
          %s189 = sand.u32 %s27, 1
          %s190 = smul.addr %s189, 64
          %s191 = scalar_lea.vmem [#allocation2], %s190
          %s192 = smul.u32 2, %s17
          %s194 = ssub.s32 1024, 1024
          %195 = vsyncadd %s188, %s194
          %s196 = smul.addr %s192, 4
          %s197 = smul.addr %s196, 128
          %s198 = scalar_lea.hbm %s0, %s197
          %s199 = sshll.u32 %s191, 4
          %s200 = int_to_ptr.vmem [resolvable:$true] %s199
          %205 = dma.hbm_to_vmem [thread:$0]  %s198, 1024, %s200, %s188, 256, 256, 16
        $region36: #{tpu_custom_call.1} parent=31 // pred_fallthru
          _
      $region32: #{tpu_custom_call.1} parent=5 // pred_fallthru
        _
      %p206 = scmp.le.s32.totalorder 1, %s17
      %p207 = scmp.lt.s32.totalorder %s17, 3
      %p208 = pnand %p206, %p207
      %p209 = pneg %p208
      // Predicated region
      $region37: #{tpu_custom_call.1} parent=5 // pred_check
        _
      $region38: #{tpu_custom_call.1} parent=5 // pred_check_branch
        %211 = sbr.rel (%p208) target = $region40
      $region39: #{tpu_custom_call.1} parent=5 // pred_region
        %s212 = ssub.s32 %s17, 1
        %s213 = sand.u32 %s30, 1
        %s214 = scalar_lea.sflag [#allocation3], %s213
        %s215 = sand.u32 %s30, 1
        %s216 = smul.addr %s215, 64
        %s217 = scalar_lea.vmem [#allocation2], %s216
        // Predicated region
        $region41: #{tpu_custom_call.1} parent=39 // pred_check
          %p218 = pneg %p43
        $region42: #{tpu_custom_call.1} parent=39 // pred_check_branch
          %220 = sbr.rel (%p218) target = $region44
        $region43: #{tpu_custom_call.1} parent=39 // pred_region
          %221 = dma.done %s214, 1024
        $region44: #{tpu_custom_call.1} parent=39 // pred_fallthru
          _
        %s222 = sand.u32 %s30, 1
        %s223 = scalar_lea.sflag [#allocation3], %s222
        %s224 = sand.u32 %s30, 1
        %s225 = smul.addr %s224, 64
        %s226 = scalar_lea.vmem [#allocation2], %s225
        %p227 = pneg %p43
        %p228 = pneg %p40
        %p229 = pneg %p64
        %p230 = pneg %p61
        %p231 = pneg %p85
        %p232 = pneg %p82
        %p233 = pneg %p106
        %p234 = pneg %p103
        %p235 = pneg %p127
        %p236 = pneg %p124
        %p237 = pneg %p153
        %p238 = pneg %p150
        %s239 = sand.u32 %s140, 1
        %s240 = scalar_lea.sflag [#allocation4], %s239
        %s241 = sand.u32 %s140, 1
        %s242 = smul.addr %s241, 32
        %s243 = scalar_lea.vmem [#allocation5], %s242
        %s244 = smul.u32 2, %s22
        %s245 = smul.u32 2, %s22
        %v247 = vld [vmem:[%s1] sm:$0xff]
        %v248 = vld [vmem:[%s1 + $0x8] sm:$0xff]
        %v249 = vld [vmem:[%s3] sm:$0xff]
        %v250 = vld [vmem:[%s3 + $0x8] sm:$0xff]
        %v251 = vld [vmem:[%s3 + $0x10] sm:$0xff]
        %v252 = vld [vmem:[%s3 + $0x18] sm:$0xff]
        %v253 = vlaneseq
        %v254 = vand.u32 %v253, 127
        %v255 = vadd.s32 %v254, 128
        %v256 = vand.u32 %v254, 15
        %v257 = vand.u32 %v255, 15
        %vm258 = vcmp.ge.s32.totalorder %v254, 16
        %vm259 = vcmp.ge.s32.totalorder %v255, 16
        %vm260 = vcmp.lt.s32.totalorder %v254, 240
        %vm261 = vcmp.lt.s32.totalorder %v255, 240
        %vm262 = vcmp.ge.s32.totalorder %v256, 1
        %vm263 = vcmp.ge.s32.totalorder %v257, 1
        %vm264 = vcmp.le.s32.totalorder %v256, 14
        %vm265 = vcmp.le.s32.totalorder %v257, 14
        %vm266 = vmand %vm258, %vm262
        %vm267 = vmand %vm259, %vm263
        %vm268 = vmand %vm258, %vm264
        %vm269 = vmand %vm259, %vm265
        %vm270 = vmand %vm260, %vm262
        %vm271 = vmand %vm261, %vm263
        %vm272 = vmand %vm260, %vm264
        %vm273 = vmand %vm261, %vm265
        %v274 = vld [vmem:[%s217] sm:$0xff]
        %v275 = vld [vmem:[%s217 + $0x8] sm:$0xff]
        %v276 = vld [vmem:[%s217 + $0x10] sm:$0xff]
        %v277 = vld [vmem:[%s217 + $0x18] sm:$0xff]
        %279 = vset.pattern.permute.xlu0 0
        %280 = vperm.xlu0 %279, %v247
        %v281 = vpop.permute.xlu0 %280
        %284 = vset.pattern.permute.xlu0 0
        %285 = vperm.xlu0 %284, %v248
        %v286 = vpop.permute.xlu0 %285
        %v288 = vmul.f32 %v274, %v281
        %v289 = vmul.f32 %v275, %v281
        %v290 = vmul.f32 %v276, %v286
        %v291 = vmul.f32 %v277, %v286
        %292 = vset.pattern.permute.xlu0 1
        %293 = vperm.xlu0 %292, %v247
        %v294 = vpop.permute.xlu0 %293
        %296 = vset.pattern.permute.xlu0 1
        %297 = vperm.xlu0 %296, %v248
        %v298 = vpop.permute.xlu0 %297
        %v300 = vadd.f32 %v288, %v294
        %v301 = vadd.f32 %v289, %v294
        %v302 = vadd.f32 %v290, %v298
        %v303 = vadd.f32 %v291, %v298
        %v304 = vmax.f32 %v300, 0.0
        %v305 = vmax.f32 %v301, 0.0
        %v306 = vmax.f32 %v302, 0.0
        %v307 = vmax.f32 %v303, 0.0
        %v308 = vld [vmem:[%s2] sm:$0xf]
        %v309 = vld [vmem:[%s2 + $0x4] sm:$0xf]
        %v310 = vld [vmem:[%s2 + $0x8] sm:$0xf]
        %v311 = vld [vmem:[%s2 + $0xc] sm:$0xf]
        %v312 = vpack.c.bf16 %v306, %v304
        %v313 = vpack.c.bf16 %v307, %v305
        %315 = vset.pattern.permute.xlu0 0
        %316 = vperm.xlu0 %315, %v249
        %v317 = vpop.permute.xlu0 %316
        %320 = vset.pattern.permute.xlu0 0
        %321 = vperm.xlu0 %320, %v250
        %v322 = vpop.permute.xlu0 %321
        %325 = vset.pattern.permute.xlu0 0
        %326 = vperm.xlu0 %325, %v251
        %v327 = vpop.permute.xlu0 %326
        %330 = vset.pattern.permute.xlu0 0
        %331 = vperm.xlu0 %330, %v252
        %v332 = vpop.permute.xlu0 %331
        %v338 = vunpack.c.l.b16 %v308
        %v339 = vunpack.c.l.b16 %v309
        %v340 = vunpack.c.l.b16 %v310
        %v341 = vunpack.c.l.b16 %v311
        %v342 = vpack.c.b16 %v339, %v338
        %v343 = vpack.c.b16 %v341, %v340
        %vm344 = vcmask 130048
        %v346 = vsel %vm344, %v342, 0
        %v349 = vsel %vm344, %v343, 0
        %351 = vmatprep.subr.bf16.mxu0 0
        %352 = vmatpush1.bf16.msra.mxu0 0
        %353 = vmatprep.subr.bf16.mxu0 0
        %354 = vmatpush1.bf16.msra.mxu0 0
        %355 = vmatprep.subr.bf16.mxu0 0
        %356 = vmatpush1.bf16.msra.mxu0 0
        %357 = vmatprep.subr.bf16.mxu0 0
        %358 = vmatpush1.bf16.msra.mxu0 0
        %359 = vmatprep.subr.bf16.mxu0 0
        %360 = vmatpush1.bf16.msra.mxu0 0
        %361 = vmatprep.subr.bf16.mxu0 0
        %362 = vmatpush1.bf16.msra.mxu0 0
        %363 = vmatprep.subr.bf16.mxu0 0
        %364 = vmatpush1.bf16.msra.mxu0 0
        %365 = vmatprep.subr.bf16.mxu0 %v313
        %366 = vmatpush1.bf16.msra.mxu0 %v312
        %367 = vmatprep.subr.bf16.mxu0 0
        %368 = vmatpush2.bf16.msra.mxu0 0
        %369 = vmatprep.subr.bf16.mxu0 0
        %370 = vmatpush2.bf16.msra.mxu0 0
        %371 = vmatprep.subr.bf16.mxu0 0
        %372 = vmatpush2.bf16.msra.mxu0 0
        %373 = vmatprep.subr.bf16.mxu0 0
        %374 = vmatpush2.bf16.msra.mxu0 0
        %375 = vmatprep.subr.bf16.mxu0 0
        %376 = vmatpush2.bf16.msra.mxu0 0
        %377 = vmatprep.subr.bf16.mxu0 0
        %378 = vmatpush2.bf16.msra.mxu0 0
        %379 = vmatprep.subr.bf16.mxu0 0
        %380 = vmatpush2.bf16.msra.mxu0 0
        %381 = vmatprep.subr.bf16.mxu0 0
        %382 = vmatpush2.bf16.msra.mxu0 0
        %383 = vmatprep.mubr.bf16.mxu0 0
        %384 = vmatmul.mubr.bf16.gmra.mxu0 %v346
        %v385 = vpop.f32.mrf.mxu0
        %v386 = vadd.f32 %v317, %v385
        %v387 = vpop.f32.mrf.mxu0
        %v388 = vadd.f32 %v317, %v387
        %v389 = vpop.f32.mrf.mxu0
        %v390 = vadd.f32 %v322, %v389
        %v391 = vpop.f32.mrf.mxu0
        %v392 = vadd.f32 %v322, %v391
        %393 = vmatprep.mubr.bf16.mxu0 0
        %394 = vmatmul.mubr.bf16.gmra.mxu0 %v349
        %v395 = vpop.f32.mrf.mxu0
        %v396 = vadd.f32 %v327, %v395
        %v397 = vpop.f32.mrf.mxu0
        %v398 = vadd.f32 %v327, %v397
        %v399 = vpop.f32.mrf.mxu0
        %v400 = vadd.f32 %v332, %v399
        %v401 = vpop.f32.mrf.mxu0
        %v402 = vadd.f32 %v332, %v401
        %403 = vdwg.mxu0
        %v404 = vmax.f32 %v386, 0.0
        %v405 = vmax.f32 %v388, 0.0
        %v406 = vmax.f32 %v390, 0.0
        %v407 = vmax.f32 %v392, 0.0
        %v408 = vmax.f32 %v396, 0.0
        %v409 = vmax.f32 %v398, 0.0
        %v410 = vmax.f32 %v400, 0.0
        %v411 = vmax.f32 %v402, 0.0
        %v412 = vpack.c.bf16 %v406, %v404
        %v413 = vpack.c.bf16 %v407, %v405
        %v414 = vpack.c.bf16 %v410, %v408
        %v415 = vpack.c.bf16 %v411, %v409
        %s416 = scalar_lea.vmem %s4, 12
        %v417 = vld [vmem:[%s416] sm:$0xf]
        %v418 = vld [vmem:[%s416 + $0x4] sm:$0xf]
        %v419 = vld [vmem:[%s416 + $0x8] sm:$0xf]
        %v423 = vunpack.c.l.b16 %v417
        %v424 = vunpack.c.l.b16 %v418
        %v425 = vunpack.c.l.b16 %v419
        %v426 = vpack.c.b16 %v424, %v423
        %v427 = vpack.c.b16 %v425, %v425
        %vm428 = vcmask 261120
        %v430 = vsel %vm428, %v426, 0
        %v433 = vsel %vm428, %v427, 0
        %435 = vmatprep.subr.bf16.mxu0 0
        %436 = vmatpush1.bf16.msra.mxu0 0
        %437 = vmatprep.subr.bf16.mxu0 0
        %438 = vmatpush1.bf16.msra.mxu0 0
        %439 = vmatprep.subr.bf16.mxu0 0
        %440 = vmatpush1.bf16.msra.mxu0 0
        %441 = vmatprep.subr.bf16.mxu0 0
        %442 = vmatpush1.bf16.msra.mxu0 0
        %443 = vmatprep.subr.bf16.mxu0 0
        %444 = vmatpush1.bf16.msra.mxu0 0
        %445 = vmatprep.subr.bf16.mxu0 0
        %446 = vmatpush1.bf16.msra.mxu0 0
        %447 = vmatprep.subr.bf16.mxu0 %v415
        %448 = vmatpush1.bf16.msra.mxu0 %v414
        %449 = vmatprep.subr.bf16.mxu0 %v413
        %450 = vmatpush1.bf16.msra.mxu0 %v412
        %451 = vmatprep.subr.bf16.mxu0 0
        %452 = vmatpush2.bf16.msra.mxu0 0
        %453 = vmatprep.subr.bf16.mxu0 0
        %454 = vmatpush2.bf16.msra.mxu0 0
        %455 = vmatprep.subr.bf16.mxu0 0
        %456 = vmatpush2.bf16.msra.mxu0 0
        %457 = vmatprep.subr.bf16.mxu0 0
        %458 = vmatpush2.bf16.msra.mxu0 0
        %459 = vmatprep.subr.bf16.mxu0 0
        %460 = vmatpush2.bf16.msra.mxu0 0
        %461 = vmatprep.subr.bf16.mxu0 0
        %462 = vmatpush2.bf16.msra.mxu0 0
        %463 = vmatprep.subr.bf16.mxu0 0
        %464 = vmatpush2.bf16.msra.mxu0 0
        %465 = vmatprep.subr.bf16.mxu0 0
        %466 = vmatpush2.bf16.msra.mxu0 0
        %467 = vmatprep.mubr.bf16.mxu0 0
        %468 = vmatmul.mubr.bf16.gmra.mxu0 %v430
        %v469 = vpop.f32.mrf.mxu0
        %v470 = vadd.f32 0.0, %v469
        %v471 = vpop.f32.mrf.mxu0
        %v472 = vadd.f32 0.0, %v471
        %v473 = vpop.f32.mrf.mxu0
        %v474 = vadd.f32 0.0, %v473
        %v475 = vpop.f32.mrf.mxu0
        %v476 = vadd.f32 0.0, %v475
        %477 = vmatprep.mubr.bf16.mxu0 0
        %478 = vmatmul.mubr.bf16.gmra.mxu0 %v433
        %v479 = vpop.f32.mrf.mxu0
        %v480 = vadd.f32 0.0, %v479
        %v481 = vpop.f32.mrf.mxu0
        %v482 = vadd.f32 0.0, %v481
        %v483 = vpop.f32.mrf.mxu0
        %v484 = vpop.f32.mrf.mxu0
        %485 = vdwg.mxu0
        %486 = vrot.lane.b32.xlu0 %v470, 1
        %v487 = vpop.permute.xlu0 %486
        %488 = vrot.lane.b32.xlu0 %v472, 1
        %v489 = vpop.permute.xlu0 %488
        %vm490 = vcmp.lt.s32.totalorder %v254, 1
        %v491 = vsel %vm490, %v487, %v489
        %v492 = vsel %vm490, %v489, %v487
        %v493 = vsel %vm262, %v492, 0.0
        %v494 = vsel %vm263, %v491, 0.0
        %v495 = vadd.f32 %v474, %v493
        %v496 = vadd.f32 %v476, %v494
        %497 = vrot.lane.b32.xlu0 %v480, 127
        %v498 = vpop.permute.xlu0 %497
        %499 = vrot.lane.b32.xlu0 %v482, 127
        %v500 = vpop.permute.xlu0 %499
        %vm501 = vcmp.lt.s32.totalorder %v254, 127
        %v502 = vsel %vm501, %v498, %v500
        %v503 = vsel %vm501, %v500, %v498
        %v504 = vsel %vm264, %v502, 0.0
        %v505 = vsel %vm265, %v503, 0.0
        %v506 = vadd.f32 %v495, %v504
        %v507 = vadd.f32 %v496, %v505
        %v508 = vld [vmem:[%s4] sm:$0xf]
        %v509 = vld [vmem:[%s4 + $0x4] sm:$0xf]
        %v510 = vld [vmem:[%s4 + $0x8] sm:$0xf]
        %v514 = vunpack.c.l.b16 %v508
        %v515 = vunpack.c.l.b16 %v509
        %v516 = vunpack.c.l.b16 %v510
        %v517 = vpack.c.b16 %v515, %v514
        %v518 = vpack.c.b16 %v516, %v516
        %v520 = vsel %vm428, %v517, 0
        %v523 = vsel %vm428, %v518, 0
        %525 = vmatprep.subr.bf16.mxu0 0
        %526 = vmatpush1.bf16.msra.mxu0 0
        %527 = vmatprep.subr.bf16.mxu0 0
        %528 = vmatpush1.bf16.msra.mxu0 0
        %529 = vmatprep.subr.bf16.mxu0 0
        %530 = vmatpush1.bf16.msra.mxu0 0
        %531 = vmatprep.subr.bf16.mxu0 0
        %532 = vmatpush1.bf16.msra.mxu0 0
        %533 = vmatprep.subr.bf16.mxu0 0
        %534 = vmatpush1.bf16.msra.mxu0 0
        %535 = vmatprep.subr.bf16.mxu0 0
        %536 = vmatpush1.bf16.msra.mxu0 0
        %537 = vmatprep.subr.bf16.mxu0 %v415
        %538 = vmatpush1.bf16.msra.mxu0 %v414
        %539 = vmatprep.subr.bf16.mxu0 %v413
        %540 = vmatpush1.bf16.msra.mxu0 %v412
        %541 = vmatprep.subr.bf16.mxu0 0
        %542 = vmatpush2.bf16.msra.mxu0 0
        %543 = vmatprep.subr.bf16.mxu0 0
        %544 = vmatpush2.bf16.msra.mxu0 0
        %545 = vmatprep.subr.bf16.mxu0 0
        %546 = vmatpush2.bf16.msra.mxu0 0
        %547 = vmatprep.subr.bf16.mxu0 0
        %548 = vmatpush2.bf16.msra.mxu0 0
        %549 = vmatprep.subr.bf16.mxu0 0
        %550 = vmatpush2.bf16.msra.mxu0 0
        %551 = vmatprep.subr.bf16.mxu0 0
        %552 = vmatpush2.bf16.msra.mxu0 0
        %553 = vmatprep.subr.bf16.mxu0 0
        %554 = vmatpush2.bf16.msra.mxu0 0
        %555 = vmatprep.subr.bf16.mxu0 0
        %556 = vmatpush2.bf16.msra.mxu0 0
        %557 = vmatprep.mubr.bf16.mxu0 0
        %558 = vmatmul.mubr.bf16.gmra.mxu0 %v520
        %v559 = vpop.f32.mrf.mxu0
        %v560 = vadd.f32 0.0, %v559
        %v561 = vpop.f32.mrf.mxu0
        %v562 = vadd.f32 0.0, %v561
        %v563 = vpop.f32.mrf.mxu0
        %v564 = vadd.f32 0.0, %v563
        %v565 = vpop.f32.mrf.mxu0
        %v566 = vadd.f32 0.0, %v565
        %567 = vmatprep.mubr.bf16.mxu0 0
        %568 = vmatmul.mubr.bf16.gmra.mxu0 %v523
        %v569 = vpop.f32.mrf.mxu0
        %v570 = vadd.f32 0.0, %v569
        %v571 = vpop.f32.mrf.mxu0
        %v572 = vadd.f32 0.0, %v571
        %v573 = vpop.f32.mrf.mxu0
        %v574 = vpop.f32.mrf.mxu0
        %575 = vdwg.mxu0
        %576 = vrot.lane.b32.xlu0 %v560, 17
        %v577 = vpop.permute.xlu0 %576
        %578 = vrot.lane.b32.xlu0 %v562, 17
        %v579 = vpop.permute.xlu0 %578
        %vm580 = vcmp.lt.s32.totalorder %v254, 17
        %v581 = vsel %vm580, %v577, %v579
        %v582 = vsel %vm580, %v579, %v577
        %v583 = vsel %vm266, %v582, 0.0
        %v584 = vsel %vm267, %v581, 0.0
        %v585 = vadd.f32 %v506, %v583
        %v586 = vadd.f32 %v507, %v584
        %587 = vrot.lane.b32.xlu0 %v564, 16
        %v588 = vpop.permute.xlu0 %587
        %589 = vrot.lane.b32.xlu0 %v566, 16
        %v590 = vpop.permute.xlu0 %589
        %vm591 = vcmp.lt.s32.totalorder %v254, 16
        %v592 = vsel %vm591, %v588, %v590
        %v593 = vsel %vm591, %v590, %v588
        %v594 = vsel %vm258, %v593, 0.0
        %v595 = vsel %vm259, %v592, 0.0
        %v596 = vadd.f32 %v585, %v594
        %v597 = vadd.f32 %v586, %v595
        %598 = vrot.lane.b32.xlu0 %v570, 15
        %v599 = vpop.permute.xlu0 %598
        %600 = vrot.lane.b32.xlu0 %v572, 15
        %v601 = vpop.permute.xlu0 %600
        %vm602 = vcmp.lt.s32.totalorder %v254, 15
        %v603 = vsel %vm602, %v599, %v601
        %v604 = vsel %vm602, %v601, %v599
        %v605 = vsel %vm268, %v604, 0.0
        %v606 = vsel %vm269, %v603, 0.0
        %v607 = vadd.f32 %v596, %v605
        %v608 = vadd.f32 %v597, %v606
        %s609 = scalar_lea.vmem %s4, 24
        %v610 = vld [vmem:[%s609] sm:$0xf]
        %v611 = vld [vmem:[%s609 + $0x4] sm:$0xf]
        %v612 = vld [vmem:[%s609 + $0x8] sm:$0xf]
        %v616 = vunpack.c.l.b16 %v610
        %v617 = vunpack.c.l.b16 %v611
        %v618 = vunpack.c.l.b16 %v612
        %v619 = vpack.c.b16 %v617, %v616
        %v620 = vpack.c.b16 %v618, %v618
        %v622 = vsel %vm428, %v619, 0
        %v625 = vsel %vm428, %v620, 0
        %627 = vmatprep.subr.bf16.mxu0 0
        %628 = vmatpush1.bf16.msra.mxu0 0
        %629 = vmatprep.subr.bf16.mxu0 0
        %630 = vmatpush1.bf16.msra.mxu0 0
        %631 = vmatprep.subr.bf16.mxu0 0
        %632 = vmatpush1.bf16.msra.mxu0 0
        %633 = vmatprep.subr.bf16.mxu0 0
        %634 = vmatpush1.bf16.msra.mxu0 0
        %635 = vmatprep.subr.bf16.mxu0 0
        %636 = vmatpush1.bf16.msra.mxu0 0
        %637 = vmatprep.subr.bf16.mxu0 0
        %638 = vmatpush1.bf16.msra.mxu0 0
        %639 = vmatprep.subr.bf16.mxu0 %v415
        %640 = vmatpush1.bf16.msra.mxu0 %v414
        %641 = vmatprep.subr.bf16.mxu0 %v413
        %642 = vmatpush1.bf16.msra.mxu0 %v412
        %643 = vmatprep.subr.bf16.mxu0 0
        %644 = vmatpush2.bf16.msra.mxu0 0
        %645 = vmatprep.subr.bf16.mxu0 0
        %646 = vmatpush2.bf16.msra.mxu0 0
        %647 = vmatprep.subr.bf16.mxu0 0
        %648 = vmatpush2.bf16.msra.mxu0 0
        %649 = vmatprep.subr.bf16.mxu0 0
        %650 = vmatpush2.bf16.msra.mxu0 0
        %651 = vmatprep.subr.bf16.mxu0 0
        %652 = vmatpush2.bf16.msra.mxu0 0
        %653 = vmatprep.subr.bf16.mxu0 0
        %654 = vmatpush2.bf16.msra.mxu0 0
        %655 = vmatprep.subr.bf16.mxu0 0
        %656 = vmatpush2.bf16.msra.mxu0 0
        %657 = vmatprep.subr.bf16.mxu0 0
        %658 = vmatpush2.bf16.msra.mxu0 0
        %659 = vmatprep.mubr.bf16.mxu0 0
        %660 = vmatmul.mubr.bf16.gmra.mxu0 %v622
        %v661 = vpop.f32.mrf.mxu0
        %v662 = vadd.f32 0.0, %v661
        %v663 = vpop.f32.mrf.mxu0
        %v664 = vadd.f32 0.0, %v663
        %v665 = vpop.f32.mrf.mxu0
        %v666 = vadd.f32 0.0, %v665
        %v667 = vpop.f32.mrf.mxu0
        %v668 = vadd.f32 0.0, %v667
        %669 = vmatprep.mubr.bf16.mxu0 0
        %670 = vmatmul.mubr.bf16.gmra.mxu0 %v625
        %v671 = vpop.f32.mrf.mxu0
        %v672 = vadd.f32 0.0, %v671
        %v673 = vpop.f32.mrf.mxu0
        %v674 = vadd.f32 0.0, %v673
        %v675 = vpop.f32.mrf.mxu0
        %v676 = vpop.f32.mrf.mxu0
        %677 = vdwg.mxu0
        %678 = vrot.lane.b32.xlu0 %v662, 113
        %v679 = vpop.permute.xlu0 %678
        %680 = vrot.lane.b32.xlu0 %v664, 113
        %v681 = vpop.permute.xlu0 %680
        %vm682 = vcmp.lt.s32.totalorder %v254, 113
        %v683 = vsel %vm682, %v679, %v681
        %v684 = vsel %vm682, %v681, %v679
        %v685 = vsel %vm270, %v683, 0.0
        %v686 = vsel %vm271, %v684, 0.0
        %v687 = vadd.f32 %v607, %v685
        %v688 = vadd.f32 %v608, %v686
        %689 = vrot.lane.b32.xlu0 %v666, 112
        %v690 = vpop.permute.xlu0 %689
        %691 = vrot.lane.b32.xlu0 %v668, 112
        %v692 = vpop.permute.xlu0 %691
        %vm693 = vcmp.lt.s32.totalorder %v254, 112
        %v694 = vsel %vm693, %v690, %v692
        %v695 = vsel %vm693, %v692, %v690
        %v696 = vsel %vm260, %v694, 0.0
        %v697 = vsel %vm261, %v695, 0.0
        %v698 = vadd.f32 %v687, %v696
        %v699 = vadd.f32 %v688, %v697
        %700 = vrot.lane.b32.xlu0 %v672, 111
        %v701 = vpop.permute.xlu0 %700
        %702 = vrot.lane.b32.xlu0 %v674, 111
        %v703 = vpop.permute.xlu0 %702
        %vm704 = vcmp.lt.s32.totalorder %v254, 111
        %v705 = vsel %vm704, %v701, %v703
        %v706 = vsel %vm704, %v703, %v701
        %v707 = vsel %vm272, %v705, 0.0
        %v708 = vsel %vm273, %v706, 0.0
        %v709 = vadd.f32 %v698, %v707
        %v710 = vadd.f32 %v699, %v708
        %711 = vst [vmem:[%s243] sm:$0xff] %v709
        %712 = vst [vmem:[%s243 + $0x8] sm:$0xff] %v710
        %s713 = scalar_lea.vmem %s217, 32 [#allocation2]
        %v714 = vld [vmem:[%s713] sm:$0xff]
        %v715 = vld [vmem:[%s713 + $0x8] sm:$0xff]
        %v716 = vld [vmem:[%s713 + $0x10] sm:$0xff]
        %v717 = vld [vmem:[%s713 + $0x18] sm:$0xff]
        %v718 = vmul.f32 %v714, %v281
        %v719 = vmul.f32 %v715, %v281
        %v720 = vmul.f32 %v716, %v286
        %v721 = vmul.f32 %v717, %v286
        %v722 = vadd.f32 %v718, %v294
        %v723 = vadd.f32 %v719, %v294
        %v724 = vadd.f32 %v720, %v298
        %v725 = vadd.f32 %v721, %v298
        %v726 = vmax.f32 %v722, 0.0
        %v727 = vmax.f32 %v723, 0.0
        %v728 = vmax.f32 %v724, 0.0
        %v729 = vmax.f32 %v725, 0.0
        %v730 = vld [vmem:[%s2] sm:$0xf]
        %v731 = vld [vmem:[%s2 + $0x4] sm:$0xf]
        %v732 = vld [vmem:[%s2 + $0x8] sm:$0xf]
        %v733 = vld [vmem:[%s2 + $0xc] sm:$0xf]
        %v734 = vpack.c.bf16 %v728, %v726
        %v735 = vpack.c.bf16 %v729, %v727
        %v740 = vunpack.c.l.b16 %v730
        %v741 = vunpack.c.l.b16 %v731
        %v742 = vunpack.c.l.b16 %v732
        %v743 = vunpack.c.l.b16 %v733
        %v744 = vpack.c.b16 %v741, %v740
        %v745 = vpack.c.b16 %v743, %v742
        %v747 = vsel %vm344, %v744, 0
        %v750 = vsel %vm344, %v745, 0
        %752 = vmatprep.subr.bf16.mxu0 0
        %753 = vmatpush1.bf16.msra.mxu0 0
        %754 = vmatprep.subr.bf16.mxu0 0
        %755 = vmatpush1.bf16.msra.mxu0 0
        %756 = vmatprep.subr.bf16.mxu0 0
        %757 = vmatpush1.bf16.msra.mxu0 0
        %758 = vmatprep.subr.bf16.mxu0 0
        %759 = vmatpush1.bf16.msra.mxu0 0
        %760 = vmatprep.subr.bf16.mxu0 0
        %761 = vmatpush1.bf16.msra.mxu0 0
        %762 = vmatprep.subr.bf16.mxu0 0
        %763 = vmatpush1.bf16.msra.mxu0 0
        %764 = vmatprep.subr.bf16.mxu0 0
        %765 = vmatpush1.bf16.msra.mxu0 0
        %766 = vmatprep.subr.bf16.mxu0 %v735
        %767 = vmatpush1.bf16.msra.mxu0 %v734
        %768 = vmatprep.subr.bf16.mxu0 0
        %769 = vmatpush2.bf16.msra.mxu0 0
        %770 = vmatprep.subr.bf16.mxu0 0
        %771 = vmatpush2.bf16.msra.mxu0 0
        %772 = vmatprep.subr.bf16.mxu0 0
        %773 = vmatpush2.bf16.msra.mxu0 0
        %774 = vmatprep.subr.bf16.mxu0 0
        %775 = vmatpush2.bf16.msra.mxu0 0
        %776 = vmatprep.subr.bf16.mxu0 0
        %777 = vmatpush2.bf16.msra.mxu0 0
        %778 = vmatprep.subr.bf16.mxu0 0
        %779 = vmatpush2.bf16.msra.mxu0 0
        %780 = vmatprep.subr.bf16.mxu0 0
        %781 = vmatpush2.bf16.msra.mxu0 0
        %782 = vmatprep.subr.bf16.mxu0 0
        %783 = vmatpush2.bf16.msra.mxu0 0
        %784 = vmatprep.mubr.bf16.mxu0 0
        %785 = vmatmul.mubr.bf16.gmra.mxu0 %v747
        %v786 = vpop.f32.mrf.mxu0
        %v787 = vadd.f32 %v317, %v786
        %v788 = vpop.f32.mrf.mxu0
        %v789 = vadd.f32 %v317, %v788
        %v790 = vpop.f32.mrf.mxu0
        %v791 = vadd.f32 %v322, %v790
        %v792 = vpop.f32.mrf.mxu0
        %v793 = vadd.f32 %v322, %v792
        %794 = vmatprep.mubr.bf16.mxu0 0
        %795 = vmatmul.mubr.bf16.gmra.mxu0 %v750
        %v796 = vpop.f32.mrf.mxu0
        %v797 = vadd.f32 %v327, %v796
        %v798 = vpop.f32.mrf.mxu0
        %v799 = vadd.f32 %v327, %v798
        %v800 = vpop.f32.mrf.mxu0
        %v801 = vadd.f32 %v332, %v800
        %v802 = vpop.f32.mrf.mxu0
        %v803 = vadd.f32 %v332, %v802
        %804 = vdwg.mxu0
        %v805 = vmax.f32 %v787, 0.0
        %v806 = vmax.f32 %v789, 0.0
        %v807 = vmax.f32 %v791, 0.0
        %v808 = vmax.f32 %v793, 0.0
        %v809 = vmax.f32 %v797, 0.0
        %v810 = vmax.f32 %v799, 0.0
        %v811 = vmax.f32 %v801, 0.0
        %v812 = vmax.f32 %v803, 0.0
        %v813 = vpack.c.bf16 %v807, %v805
        %v814 = vpack.c.bf16 %v808, %v806
        %v815 = vpack.c.bf16 %v811, %v809
        %v816 = vpack.c.bf16 %v812, %v810
        %v817 = vld [vmem:[%s416] sm:$0xf]
        %v818 = vld [vmem:[%s416 + $0x4] sm:$0xf]
        %v819 = vld [vmem:[%s416 + $0x8] sm:$0xf]
        %v823 = vunpack.c.l.b16 %v817
        %v824 = vunpack.c.l.b16 %v818
        %v825 = vunpack.c.l.b16 %v819
        %v826 = vpack.c.b16 %v824, %v823
        %v827 = vpack.c.b16 %v825, %v825
        %v829 = vsel %vm428, %v826, 0
        %v832 = vsel %vm428, %v827, 0
        %834 = vmatprep.subr.bf16.mxu0 0
        %835 = vmatpush1.bf16.msra.mxu0 0
        %836 = vmatprep.subr.bf16.mxu0 0
        %837 = vmatpush1.bf16.msra.mxu0 0
        %838 = vmatprep.subr.bf16.mxu0 0
        %839 = vmatpush1.bf16.msra.mxu0 0
        %840 = vmatprep.subr.bf16.mxu0 0
        %841 = vmatpush1.bf16.msra.mxu0 0
        %842 = vmatprep.subr.bf16.mxu0 0
        %843 = vmatpush1.bf16.msra.mxu0 0
        %844 = vmatprep.subr.bf16.mxu0 0
        %845 = vmatpush1.bf16.msra.mxu0 0
        %846 = vmatprep.subr.bf16.mxu0 %v816
        %847 = vmatpush1.bf16.msra.mxu0 %v815
        %848 = vmatprep.subr.bf16.mxu0 %v814
        %849 = vmatpush1.bf16.msra.mxu0 %v813
        %850 = vmatprep.subr.bf16.mxu0 0
        %851 = vmatpush2.bf16.msra.mxu0 0
        %852 = vmatprep.subr.bf16.mxu0 0
        %853 = vmatpush2.bf16.msra.mxu0 0
        %854 = vmatprep.subr.bf16.mxu0 0
        %855 = vmatpush2.bf16.msra.mxu0 0
        %856 = vmatprep.subr.bf16.mxu0 0
        %857 = vmatpush2.bf16.msra.mxu0 0
        %858 = vmatprep.subr.bf16.mxu0 0
        %859 = vmatpush2.bf16.msra.mxu0 0
        %860 = vmatprep.subr.bf16.mxu0 0
        %861 = vmatpush2.bf16.msra.mxu0 0
        %862 = vmatprep.subr.bf16.mxu0 0
        %863 = vmatpush2.bf16.msra.mxu0 0
        %864 = vmatprep.subr.bf16.mxu0 0
        %865 = vmatpush2.bf16.msra.mxu0 0
        %866 = vmatprep.mubr.bf16.mxu0 0
        %867 = vmatmul.mubr.bf16.gmra.mxu0 %v829
        %v868 = vpop.f32.mrf.mxu0
        %v869 = vadd.f32 0.0, %v868
        %v870 = vpop.f32.mrf.mxu0
        %v871 = vadd.f32 0.0, %v870
        %v872 = vpop.f32.mrf.mxu0
        %v873 = vadd.f32 0.0, %v872
        %v874 = vpop.f32.mrf.mxu0
        %v875 = vadd.f32 0.0, %v874
        %876 = vmatprep.mubr.bf16.mxu0 0
        %877 = vmatmul.mubr.bf16.gmra.mxu0 %v832
        %v878 = vpop.f32.mrf.mxu0
        %v879 = vadd.f32 0.0, %v878
        %v880 = vpop.f32.mrf.mxu0
        %v881 = vadd.f32 0.0, %v880
        %v882 = vpop.f32.mrf.mxu0
        %v883 = vpop.f32.mrf.mxu0
        %884 = vdwg.mxu0
        %885 = vrot.lane.b32.xlu0 %v869, 1
        %v886 = vpop.permute.xlu0 %885
        %887 = vrot.lane.b32.xlu0 %v871, 1
        %v888 = vpop.permute.xlu0 %887
        %v889 = vsel %vm490, %v886, %v888
        %v890 = vsel %vm490, %v888, %v886
        %v891 = vsel %vm262, %v890, 0.0
        %v892 = vsel %vm263, %v889, 0.0
        %v893 = vadd.f32 %v873, %v891
        %v894 = vadd.f32 %v875, %v892
        %895 = vrot.lane.b32.xlu0 %v879, 127
        %v896 = vpop.permute.xlu0 %895
        %897 = vrot.lane.b32.xlu0 %v881, 127
        %v898 = vpop.permute.xlu0 %897
        %v899 = vsel %vm501, %v896, %v898
        %v900 = vsel %vm501, %v898, %v896
        %v901 = vsel %vm264, %v899, 0.0
        %v902 = vsel %vm265, %v900, 0.0
        %v903 = vadd.f32 %v893, %v901
        %v904 = vadd.f32 %v894, %v902
        %v905 = vld [vmem:[%s4] sm:$0xf]
        %v906 = vld [vmem:[%s4 + $0x4] sm:$0xf]
        %v907 = vld [vmem:[%s4 + $0x8] sm:$0xf]
        %v911 = vunpack.c.l.b16 %v905
        %v912 = vunpack.c.l.b16 %v906
        %v913 = vunpack.c.l.b16 %v907
        %v914 = vpack.c.b16 %v912, %v911
        %v915 = vpack.c.b16 %v913, %v913
        %v917 = vsel %vm428, %v914, 0
        %v920 = vsel %vm428, %v915, 0
        %922 = vmatprep.subr.bf16.mxu0 0
        %923 = vmatpush1.bf16.msra.mxu0 0
        %924 = vmatprep.subr.bf16.mxu0 0
        %925 = vmatpush1.bf16.msra.mxu0 0
        %926 = vmatprep.subr.bf16.mxu0 0
        %927 = vmatpush1.bf16.msra.mxu0 0
        %928 = vmatprep.subr.bf16.mxu0 0
        %929 = vmatpush1.bf16.msra.mxu0 0
        %930 = vmatprep.subr.bf16.mxu0 0
        %931 = vmatpush1.bf16.msra.mxu0 0
        %932 = vmatprep.subr.bf16.mxu0 0
        %933 = vmatpush1.bf16.msra.mxu0 0
        %934 = vmatprep.subr.bf16.mxu0 %v816
        %935 = vmatpush1.bf16.msra.mxu0 %v815
        %936 = vmatprep.subr.bf16.mxu0 %v814
        %937 = vmatpush1.bf16.msra.mxu0 %v813
        %938 = vmatprep.subr.bf16.mxu0 0
        %939 = vmatpush2.bf16.msra.mxu0 0
        %940 = vmatprep.subr.bf16.mxu0 0
        %941 = vmatpush2.bf16.msra.mxu0 0
        %942 = vmatprep.subr.bf16.mxu0 0
        %943 = vmatpush2.bf16.msra.mxu0 0
        %944 = vmatprep.subr.bf16.mxu0 0
        %945 = vmatpush2.bf16.msra.mxu0 0
        %946 = vmatprep.subr.bf16.mxu0 0
        %947 = vmatpush2.bf16.msra.mxu0 0
        %948 = vmatprep.subr.bf16.mxu0 0
        %949 = vmatpush2.bf16.msra.mxu0 0
        %950 = vmatprep.subr.bf16.mxu0 0
        %951 = vmatpush2.bf16.msra.mxu0 0
        %952 = vmatprep.subr.bf16.mxu0 0
        %953 = vmatpush2.bf16.msra.mxu0 0
        %954 = vmatprep.mubr.bf16.mxu0 0
        %955 = vmatmul.mubr.bf16.gmra.mxu0 %v917
        %v956 = vpop.f32.mrf.mxu0
        %v957 = vadd.f32 0.0, %v956
        %v958 = vpop.f32.mrf.mxu0
        %v959 = vadd.f32 0.0, %v958
        %v960 = vpop.f32.mrf.mxu0
        %v961 = vadd.f32 0.0, %v960
        %v962 = vpop.f32.mrf.mxu0
        %v963 = vadd.f32 0.0, %v962
        %964 = vmatprep.mubr.bf16.mxu0 0
        %965 = vmatmul.mubr.bf16.gmra.mxu0 %v920
        %v966 = vpop.f32.mrf.mxu0
        %v967 = vadd.f32 0.0, %v966
        %v968 = vpop.f32.mrf.mxu0
        %v969 = vadd.f32 0.0, %v968
        %v970 = vpop.f32.mrf.mxu0
        %v971 = vpop.f32.mrf.mxu0
        %972 = vdwg.mxu0
        %973 = vrot.lane.b32.xlu0 %v957, 17
        %v974 = vpop.permute.xlu0 %973
        %975 = vrot.lane.b32.xlu0 %v959, 17
        %v976 = vpop.permute.xlu0 %975
        %v977 = vsel %vm580, %v974, %v976
        %v978 = vsel %vm580, %v976, %v974
        %v979 = vsel %vm266, %v978, 0.0
        %v980 = vsel %vm267, %v977, 0.0
        %v981 = vadd.f32 %v903, %v979
        %v982 = vadd.f32 %v904, %v980
        %983 = vrot.lane.b32.xlu0 %v961, 16
        %v984 = vpop.permute.xlu0 %983
        %985 = vrot.lane.b32.xlu0 %v963, 16
        %v986 = vpop.permute.xlu0 %985
        %v987 = vsel %vm591, %v984, %v986
        %v988 = vsel %vm591, %v986, %v984
        %v989 = vsel %vm258, %v988, 0.0
        %v990 = vsel %vm259, %v987, 0.0
        %v991 = vadd.f32 %v981, %v989
        %v992 = vadd.f32 %v982, %v990
        %993 = vrot.lane.b32.xlu0 %v967, 15
        %v994 = vpop.permute.xlu0 %993
        %995 = vrot.lane.b32.xlu0 %v969, 15
        %v996 = vpop.permute.xlu0 %995
        %v997 = vsel %vm602, %v994, %v996
        %v998 = vsel %vm602, %v996, %v994
        %v999 = vsel %vm268, %v998, 0.0
        %v1000 = vsel %vm269, %v997, 0.0
        %v1001 = vadd.f32 %v991, %v999
        %v1002 = vadd.f32 %v992, %v1000
        %v1003 = vld [vmem:[%s609] sm:$0xf]
        %v1004 = vld [vmem:[%s609 + $0x4] sm:$0xf]
        %v1005 = vld [vmem:[%s609 + $0x8] sm:$0xf]
        %v1009 = vunpack.c.l.b16 %v1003
        %v1010 = vunpack.c.l.b16 %v1004
        %v1011 = vunpack.c.l.b16 %v1005
        %v1012 = vpack.c.b16 %v1010, %v1009
        %v1013 = vpack.c.b16 %v1011, %v1011
        %v1015 = vsel %vm428, %v1012, 0
        %v1018 = vsel %vm428, %v1013, 0
        %1020 = vmatprep.subr.bf16.mxu0 0
        %1021 = vmatpush1.bf16.msra.mxu0 0
        %1022 = vmatprep.subr.bf16.mxu0 0
        %1023 = vmatpush1.bf16.msra.mxu0 0
        %1024 = vmatprep.subr.bf16.mxu0 0
        %1025 = vmatpush1.bf16.msra.mxu0 0
        %1026 = vmatprep.subr.bf16.mxu0 0
        %1027 = vmatpush1.bf16.msra.mxu0 0
        %1028 = vmatprep.subr.bf16.mxu0 0
        %1029 = vmatpush1.bf16.msra.mxu0 0
        %1030 = vmatprep.subr.bf16.mxu0 0
        %1031 = vmatpush1.bf16.msra.mxu0 0
        %1032 = vmatprep.subr.bf16.mxu0 %v816
        %1033 = vmatpush1.bf16.msra.mxu0 %v815
        %1034 = vmatprep.subr.bf16.mxu0 %v814
        %1035 = vmatpush1.bf16.msra.mxu0 %v813
        %1036 = vmatprep.subr.bf16.mxu0 0
        %1037 = vmatpush2.bf16.msra.mxu0 0
        %1038 = vmatprep.subr.bf16.mxu0 0
        %1039 = vmatpush2.bf16.msra.mxu0 0
        %1040 = vmatprep.subr.bf16.mxu0 0
        %1041 = vmatpush2.bf16.msra.mxu0 0
        %1042 = vmatprep.subr.bf16.mxu0 0
        %1043 = vmatpush2.bf16.msra.mxu0 0
        %1044 = vmatprep.subr.bf16.mxu0 0
        %1045 = vmatpush2.bf16.msra.mxu0 0
        %1046 = vmatprep.subr.bf16.mxu0 0
        %1047 = vmatpush2.bf16.msra.mxu0 0
        %1048 = vmatprep.subr.bf16.mxu0 0
        %1049 = vmatpush2.bf16.msra.mxu0 0
        %1050 = vmatprep.subr.bf16.mxu0 0
        %1051 = vmatpush2.bf16.msra.mxu0 0
        %1052 = vmatprep.mubr.bf16.mxu0 0
        %1053 = vmatmul.mubr.bf16.gmra.mxu0 %v1015
        %v1054 = vpop.f32.mrf.mxu0
        %v1055 = vadd.f32 0.0, %v1054
        %v1056 = vpop.f32.mrf.mxu0
        %v1057 = vadd.f32 0.0, %v1056
        %v1058 = vpop.f32.mrf.mxu0
        %v1059 = vadd.f32 0.0, %v1058
        %v1060 = vpop.f32.mrf.mxu0
        %v1061 = vadd.f32 0.0, %v1060
        %1062 = vmatprep.mubr.bf16.mxu0 0
        %1063 = vmatmul.mubr.bf16.gmra.mxu0 %v1018
        %v1064 = vpop.f32.mrf.mxu0
        %v1065 = vadd.f32 0.0, %v1064
        %v1066 = vpop.f32.mrf.mxu0
        %v1067 = vadd.f32 0.0, %v1066
        %v1068 = vpop.f32.mrf.mxu0
        %v1069 = vpop.f32.mrf.mxu0
        %1070 = vdwg.mxu0
        %1071 = vrot.lane.b32.xlu0 %v1055, 113
        %v1072 = vpop.permute.xlu0 %1071
        %1073 = vrot.lane.b32.xlu0 %v1057, 113
        %v1074 = vpop.permute.xlu0 %1073
        %v1075 = vsel %vm682, %v1072, %v1074
        %v1076 = vsel %vm682, %v1074, %v1072
        %v1077 = vsel %vm270, %v1075, 0.0
        %v1078 = vsel %vm271, %v1076, 0.0
        %v1079 = vadd.f32 %v1001, %v1077
        %v1080 = vadd.f32 %v1002, %v1078
        %1081 = vrot.lane.b32.xlu0 %v1059, 112
        %v1082 = vpop.permute.xlu0 %1081
        %1083 = vrot.lane.b32.xlu0 %v1061, 112
        %v1084 = vpop.permute.xlu0 %1083
        %v1085 = vsel %vm693, %v1082, %v1084
        %v1086 = vsel %vm693, %v1084, %v1082
        %v1087 = vsel %vm260, %v1085, 0.0
        %v1088 = vsel %vm261, %v1086, 0.0
        %v1089 = vadd.f32 %v1079, %v1087
        %v1090 = vadd.f32 %v1080, %v1088
        %1091 = vrot.lane.b32.xlu0 %v1065, 111
        %v1092 = vpop.permute.xlu0 %1091
        %1093 = vrot.lane.b32.xlu0 %v1067, 111
        %v1094 = vpop.permute.xlu0 %1093
        %v1095 = vsel %vm704, %v1092, %v1094
        %v1096 = vsel %vm704, %v1094, %v1092
        %v1097 = vsel %vm272, %v1095, 0.0
        %v1098 = vsel %vm273, %v1096, 0.0
        %v1099 = vadd.f32 %v1089, %v1097
        %v1100 = vadd.f32 %v1090, %v1098
        %s1101 = scalar_lea.vmem %s243, 16 [#allocation5]
        %1102 = vst [vmem:[%s1101] sm:$0xff] %v1099
        %1103 = vst [vmem:[%s1101 + $0x8] sm:$0xff] %v1100
        %s1104 = sand.u32 %s140, 1
        %s1105 = scalar_lea.sflag [#allocation4], %s1104
        %s1106 = sand.u32 %s140, 1
        %s1107 = smul.addr %s1106, 32
        %s1108 = scalar_lea.vmem [#allocation5], %s1107
        // Predicated region
        $region45: #{tpu_custom_call.1} parent=39 // pred_check
          %p1109 = pneg %p150
        $region46: #{tpu_custom_call.1} parent=39 // pred_check_branch
          %1111 = sbr.rel (%p1109) target = $region48
        $region47: #{tpu_custom_call.1} parent=39 // pred_region
          %s1112 = smul.u32 2, %s22
          %s1114 = ssub.s32 512, 512
          %1115 = vsyncadd %s1105, %s1114
          %s1116 = smul.addr %s1112, 2
          %s1117 = smul.addr %s1116, 128
          %s1118 = scalar_lea.hbm %s5, %s1117
          %s1119 = sshll.u32 %s1108, 4
          %s1120 = int_to_ptr.vmem [resolvable:$true] %s1119
          %1125 = dma.vmem_to_hbm [thread:$0]  %s1120, 512, %s1118, %s1105, 256, 256, 16
        $region48: #{tpu_custom_call.1} parent=39 // pred_fallthru
          _
      $region40: #{tpu_custom_call.1} parent=5 // pred_fallthru
        _
      %p1126 = scmp.le.s32.totalorder 2, %s17
      // Predicated region
      $region49: #{tpu_custom_call.1} parent=5 // pred_check
        %p1127 = pneg %p1126
      $region50: #{tpu_custom_call.1} parent=5 // pred_check_branch
        %1129 = sbr.rel (%p1127) target = $region52
      $region51: #{tpu_custom_call.1} parent=5 // pred_region
        %s1130 = ssub.s32 %s17, 2
        // Predicated region
        $region53: #{tpu_custom_call.1} parent=51 // pred_check
          %p1131 = pneg %p156
        $region54: #{tpu_custom_call.1} parent=51 // pred_check_branch
          %1133 = sbr.rel (%p1131) target = $region56
        $region55: #{tpu_custom_call.1} parent=51 // pred_region
          %s1134 = sand.u32 %s141, 1
          %s1135 = scalar_lea.sflag [#allocation4], %s1134
          %s1136 = sand.u32 %s141, 1
          %s1137 = smul.addr %s1136, 32
          %s1138 = scalar_lea.vmem [#allocation5], %s1137
          %1139 = dma.done %s1135, 512
        $region56: #{tpu_custom_call.1} parent=51 // pred_fallthru
          _
      $region52: #{tpu_custom_call.1} parent=5 // pred_fallthru
        _
    $region6: #{tpu_custom_call.1} parent=1 // loop_footer
      %s21 = sadd.s32 1, %s17
    $region7: #{tpu_custom_call.1} parent=1 // loop_footer_branch
      %16 = sbr.rel target = $region3
    $region8: #{tpu_custom_call.1} parent=1 // loop_exit
      _
    %1140 = vsyncpa [#allocation3], 1
    %s1141 = scalar_lea.sflag [#allocation3], 1
    %1142 = vsyncpa %s1141, 1
    %1143 = vsyncpa [#allocation4], 1
    %s1144 = scalar_lea.sflag [#allocation4], 1
    %1145 = vsyncpa %s1144, 1

</llo_original>
